<compile_context>
chip_gen: v6e
topology: v6e:2x2x1
jax: 0.10.0
libtpu: 0.0.40
codegen_flags: <defaults>
</compile_context>

<pallas_src>
import functools

import jax
import jax.numpy as jnp
from jax.experimental import pallas as pl
from jax.experimental.pallas import tpu as pltpu

MM_DTYPE = jnp.bfloat16  # MXU operand dtype (accumulation stays f32)


def _apply_act(y, act):
    if act == "relu":
        return jnp.maximum(y, 0.0)
    # the PyTorch module uses SiLU for any non-'relu' choice
    return y * jax.nn.sigmoid(y)


# --------------------------- VMEM budget / tiling ------------------------------------
def _vmem_limit_bytes():
    cap = 64 * 1024 * 1024  # conservative default (v7x per-TC)
    try:
        info = pltpu.get_tpu_info()
        cap = int(getattr(info, "vmem_capacity_bytes", cap) or cap)
    except Exception:
        pass
    return max(32 * 1024 * 1024, min((cap * 3) // 4, 96 * 1024 * 1024))


def _estimate_vmem_bytes(H, W, Cin, Ch, Cout, k, TH):
    P = k // 2
    SH = TH + 2 * P
    lane_h = W * Ch
    x_blk = 2 * H * W * Cin * 2                      # bf16 full-image block, double-buffered
    o_blk = 2 * TH * W * Cout * 4                    # f32 output tile, double-buffered
    wts = 2 * 2 * W * W * (Cin * Ch + Ch * Cout + Cin * Cout)   # bf16 block-diag weights
    wts += 2 * 4 * (k * k + 6) * lane_h              # f32 tap weights + folded biases
    tmp = 4 * 4 * SH * lane_h                        # h, rolled copy, acc, y (f32)
    return x_blk + o_blk + wts + tmp


def _pick_tile_h(H, W, Cin, Ch, Cout, k, use_se, budget):
    """Prefer TH = H (whole image: no halo recompute, SE fully fused).  Fall back to
    the largest row tile that divides H, is a multiple of 8, covers the halo and fits
    the VMEM budget."""
    P = k // 2
    if use_se:
        # TODO(synk): two-stage (partial-pool) SE path for images too large for VMEM.
        return H
    if _estimate_vmem_bytes(H, W, Cin, Ch, Cout, k, H) <= budget:
        return H
    cands = [t for t in range(8, H, 8) if H % t == 0 and t >= max(P, 1)]
    for t in sorted(cands, reverse=True):
        if _estimate_vmem_bytes(H, W, Cin, Ch, Cout, k, t) <= budget:
            return t
    return min(cands) if cands else H


# --------------------------------- fused kernel --------------------------------------
def _make_kernel(*, H, W, Cin, Ch, Cout, k, TH, act, use_se, sc_is_conv):
    P = k // 2
    SH = TH + 2 * P
    WCh = W * Ch
    WCout = W * Cout
    whole_image = (TH == H)

    def kernel(*refs):
        it = iter(refs)
        x_ref = next(it)
        we_ref, b1_ref = next(it), next(it)
        wd_ref, b2_ref = next(it), next(it)
        wp_ref, b3_ref = next(it), next(it)
        if sc_is_conv:
            wsc_ref, bsc_ref = next(it), next(it)
        if use_se:
            sw1_ref, sb1_ref, sw2_ref, sb2_ref = next(it), next(it), next(it), next(it)
        o_ref = next(it)

        # ---- rows for the 1x1 expansion (body + depthwise row halo) ----
        if whole_image:
            x_body = x_ref[0]                                          # (H, W*Cin) bf16
            h = jnp.dot(x_body, we_ref[...], preferred_element_type=jnp.float32)
            h = _apply_act(h + b1_ref[...], act)                       # (H, W*Ch)
            if P > 0:  # 'same' zero row halo for the depthwise
                zrow = jnp.zeros((P, WCh), jnp.float32)
                h = jnp.concatenate([zrow, h, zrow], axis=0)           # (SH, W*Ch)
        else:
            r0 = pl.multiple_of(pl.program_id(1) * TH, TH)
            x_body = x_ref[0, pl.ds(r0, TH), :]                        # (TH, W*Cin)
            top = x_ref[0, pl.ds(jnp.maximum(r0 - P, 0), P), :]
            bot = x_ref[0, pl.ds(jnp.minimum(r0 + TH, H - P), P), :]
            x_slab = jnp.concatenate([top, x_body, bot], axis=0)       # (SH, W*Cin)
            h = jnp.dot(x_slab, we_ref[...], preferred_element_type=jnp.float32)
            h = _apply_act(h + b1_ref[...], act)
            if P > 0:  # zero out-of-image halo rows with one iota mask multiply
                rows = r0 - P + jax.lax.broadcasted_iota(jnp.int32, (SH, 1), 0)
                mask = jnp.logical_and(rows >= 0, rows < H).astype(jnp.float32)
                h = h * mask

        # ---- depthwise k x k, stride 1 (VPU, lane-dense; BN + col masks in weights) --
        wd = wd_ref[...]                                               # (k*k, W*Ch)
        acc = jnp.zeros((TH, WCh), jnp.float32)
        for dj in range(k):
            shift = ((P - dj) * Ch) % WCh
            hc = h if shift == 0 else jnp.roll(h, shift, axis=-1)      # lane rotation
            for di in range(k):
                t = di * k + dj
                acc = acc + hc[di:di + TH, :] * wd[t:t + 1, :]
        y = _apply_act(acc + b2_ref[...], act)                         # (TH, W*Ch)

        # ---- 1x1 projection (block-diagonal, MXU) ----
        out = jnp.dot(y.astype(MM_DTYPE), wp_ref[...],
                      preferred_element_type=jnp.float32) + b3_ref[...]  # (TH, W*Cout)

        # ---- squeeze-and-excitation (whole image resident -> fused, gate once) ----
        if use_se:
            pooled = jnp.sum(out, axis=0, keepdims=True)               # (1, W*Cout)
            g = jnp.dot(pooled, sw1_ref[...],
                        preferred_element_type=jnp.float32) + sb1_ref[...]
            g = jnp.maximum(g, 0.0)
            g = jnp.dot(g, sw2_ref[...],
                        preferred_element_type=jnp.float32) + sb2_ref[...]
            gate = jax.nn.sigmoid(g)                                   # (1, Cout)
            out = out * jnp.tile(gate, (1, W))                         # (1, W*Cout)

        # ---- shortcut + residual ----
        if sc_is_conv:
            sc = jnp.dot(x_body, wsc_ref[...],
                         preferred_element_type=jnp.float32) + bsc_ref[...]
        else:
            sc = x_body.astype(jnp.float32)    # identity (Cin == Cout, same lane layout)
        o_ref[...] = (out + sc).reshape(1, TH, WCout)                  # lane-dense store

    return kernel


# ------------------------------------ forward ----------------------------------------
def _mobilenet_block_lanedense(x_ld, prm, *, H, W, Cin, activation, use_se):
    N = x_ld.shape[0]
    we = prm["w_expand"]
    Ch = we.shape[1]
    wp = prm["w_project"]
    Cout = wp.shape[1]
    wd = prm["w_dw"]
    k = wd.shape[0]
    P = k // 2
    s1, b1 = prm["bn1"]
    s2, b2 = prm["bn2"]
    s3, b3 = prm["bn3"]
    sc_is_conv = "w_shortcut" in prm

    eye_w = jnp.eye(W, dtype=jnp.float32)

    # Fold BN into the 1x1 weights; build W-block-diagonal (lane-dense) versions.
    we_bd = jnp.kron(eye_w, we * s1).astype(MM_DTYPE)            # (W*Cin, W*Ch)
    b1_t = jnp.tile(b1, (1, W))                                  # (1, W*Ch)
    wp_bd = jnp.kron(eye_w, wp * s3).astype(MM_DTYPE)            # (W*Ch, W*Cout)
    b3_t = jnp.tile(b3, (1, W))                                  # (1, W*Cout)

    # Depthwise taps: BN scale and the 'same' column zero-padding baked per tap row.
    taps = []
    for di in range(k):
        for dj in range(k):
            tap = (wd[di, dj] * s2[0]).reshape(1, Ch)            # (1, Ch)
            colmask = jnp.asarray(
                [1.0 if 0 <= j + dj - P < W else 0.0 for j in range(W)],
                jnp.float32).reshape(W, 1)
            taps.append((colmask * tap).reshape(W * Ch))
    wdt = jnp.stack(taps, axis=0)                                # (k*k, W*Ch)
    b2_t = jnp.tile(b2, (1, W))

    def bcast(a):
        nd = a.ndim
        return pl.BlockSpec(a.shape, lambda n, r: (0,) * nd)

    args = [x_ld, we_bd, b1_t, wdt, b2_t, wp_bd, b3_t]
    specs = [pl.BlockSpec((1, H, W * Cin), lambda n, r: (n, 0, 0))]
    specs += [bcast(a) for a in args[1:]]
    if sc_is_conv:
        wsc_bd = jnp.kron(eye_w, prm["w_shortcut"]).astype(MM_DTYPE)  # (W*Cin, W*Cout)
        bsc_t = jnp.tile(prm["b_shortcut"], (1, W))
        args += [wsc_bd, bsc_t]
        specs += [bcast(wsc_bd), bcast(bsc_t)]
    if use_se:
        # Fold the W-repeat and the 1/(H*W) global-average into the first SE matmul.
        sw1_f = jnp.kron(jnp.ones((W, 1), jnp.float32), prm["se_w1"]) / float(H * W)
        se_args = [sw1_f, prm["se_b1"], prm["se_w2"], prm["se_b2"]]
        args += se_args
        specs += [bcast(a) for a in se_args]

    vmem_limit = _vmem_limit_bytes()
    TH = _pick_tile_h(H, W, Cin, Ch, Cout, k, use_se, vmem_limit // 2)
    R = H // TH

    kernel = _make_kernel(H=H, W=W, Cin=Cin, Ch=Ch, Cout=Cout, k=k, TH=TH,
                          act=activation, use_se=use_se, sc_is_conv=sc_is_conv)
    return pl.pallas_call(
        kernel,
        grid=(N, R),
        in_specs=specs,
        out_specs=pl.BlockSpec((1, TH, W * Cout), lambda n, r: (n, r, 0)),
        out_shape=jax.ShapeDtypeStruct((N, H, W * Cout), jnp.float32),
        compiler_params=pltpu.CompilerParams(
            dimension_semantics=("parallel", "parallel"),
            vmem_limit_bytes=vmem_limit),
    )(*args)


@functools.partial(jax.jit, static_argnames=("activation", "use_se"))
def mobilenet_block(x_nchw, params, *, activation, use_se):
    # TODO(synk): accept/return NHWC directly to avoid the two XLA transpose passes;
    # BatchNorm uses folded running statistics (inference mode), not batch stats.
    N, Cin, H, W = x_nchw.shape
    x = jnp.transpose(x_nchw, (0, 2, 3, 1)).reshape(N, H, W * Cin).astype(MM_DTYPE)
    y = _mobilenet_block_lanedense(x, params, H=H, W=W, Cin=Cin,
                                   activation=activation, use_se=use_se)
    Cout = params["w_project"].shape[1]
    return jnp.transpose(y.reshape(N, H, W, Cout), (0, 3, 1, 2))


# ------------------------------ pure-JAX reference -----------------------------------
def mobilenet_block_reference(x_nchw, params, *, activation, use_se):
    x = jnp.transpose(x_nchw, (0, 2, 3, 1)).astype(jnp.float32)
    n, h, w, cin = x.shape
    s1, b1 = params["bn1"]
    s2, b2 = params["bn2"]
    s3, b3 = params["bn3"]
    hm = _apply_act(jnp.einsum("nhwc,cd->nhwd", x, params["w_expand"]) * s1 + b1,
                    activation)
    k = params["w_dw"].shape[0]
    p = k // 2
    hp = jnp.pad(hm, ((0, 0), (p, p), (p, p), (0, 0)))
    acc = jnp.zeros_like(hm)
    for di in range(k):
        for dj in range(k):
            acc = acc + hp[:, di:di + h, dj:dj + w, :] * params["w_dw"][di, dj]
    y = _apply_act(acc * s2 + b2, activation)
    out = jnp.einsum("nhwc,cd->nhwd", y, params["w_project"]) * s3 + b3
    if "w_shortcut" in params:
        sc = jnp.einsum("nhwc,cd->nhwd", x, params["w_shortcut"]) + params["b_shortcut"]
    else:
        sc = x
    if use_se:
        pooled = jnp.mean(out, axis=(1, 2))
        g = jnp.maximum(pooled @ params["se_w1"] + params["se_b1"], 0.0)
        se = jax.nn.sigmoid(g @ params["se_w2"] + params["se_b2"])
        out = out * se[:, None, None, :]
    out = out + sc
    return jnp.transpose(out, (0, 3, 1, 2))


# ----------------------------- parameter construction --------------------------------
def init_params(key, in_ch, out_ch, k, expand_ratio, use_se):
    hidden = int(in_ch * expand_ratio)
    keys = jax.random.split(key, 12)
    eps = 1e-5

    def bn(kk, c):
        kg, kb, km, kv = jax.random.split(kk, 4)
        gamma = 1.0 + 0.1 * jax.random.normal(kg, (c,), jnp.float32)
        beta = 0.1 * jax.random.normal(kb, (c,), jnp.float32)
        mean = 0.1 * jax.random.normal(km, (c,), jnp.float32)
        var = jnp.abs(jax.random.normal(kv, (c,), jnp.float32)) + 0.5
        scale = gamma / jnp.sqrt(var + eps)
        bias = beta - mean * scale
        return scale.reshape(1, c), bias.reshape(1, c)

    p = {
        "w_expand": 0.1 * jax.random.normal(keys[0], (in_ch, hidden), jnp.float32),
        "bn1": bn(keys[1], hidden),
        "w_dw": 0.1 * jax.random.normal(keys[2], (k, k, hidden), jnp.float32),
        "bn2": bn(keys[3], hidden),
        "w_project": 0.1 * jax.random.normal(keys[4], (hidden, out_ch), jnp.float32),
        "bn3": bn(keys[5], out_ch),
    }
    if use_se:
        cr = max(out_ch // 4, 1)
        p["se_w1"] = 0.1 * jax.random.normal(keys[6], (out_ch, cr), jnp.float32)
        p["se_b1"] = 0.1 * jax.random.normal(keys[7], (1, cr), jnp.float32)
        p["se_w2"] = 0.1 * jax.random.normal(keys[8], (cr, out_ch), jnp.float32)
        p["se_b2"] = 0.1 * jax.random.normal(keys[9], (1, out_ch), jnp.float32)
    if in_ch != out_ch:
        p["w_shortcut"] = 0.1 * jax.random.normal(keys[10], (in_ch, out_ch), jnp.float32)
        p["b_shortcut"] = 0.1 * jax.random.normal(keys[11], (1, out_ch), jnp.float32)
    return p


if __name__ == "__main__":
    key = jax.random.PRNGKey(0)
    kx, kp0, kp1, kp2, kp3 = jax.random.split(key, 5)

    N, H, W = 2, 16, 16
    x = jax.random.normal(kx, (N, 8, H, W), jnp.float32)

    configs = [
        # (out_ch, kernel_size, expand_ratio, activation, use_se)
        (8, 3, 2, "silu", True),    # identity shortcut + SE (fully fused, incl. SE)
        (16, 3, 2, "silu", True),   # 1x1-conv shortcut + SE
        (8, 3, 2, "relu", False),   # identity shortcut
        (16, 5, 2, "relu", False),  # 1x1-conv shortcut, 5x5 depthwise
    ]
    for (cout, k, er, act, use_se), pk in zip(configs, [kp0, kp1, kp2, kp3]):
        params = init_params(pk, 8, cout, k, er, use_se)
        y = jax.block_until_ready(
            mobilenet_block(x, params, activation=act, use_se=use_se))
        assert y.shape == (N, cout, H, W)
        assert bool(jnp.all(jnp.isfinite(y)))
        y_ref = mobilenet_block_reference(x, params, activation=act, use_se=use_se)
        err = float(jnp.max(jnp.abs(y - y_ref)))
        scale = float(jnp.max(jnp.abs(y_ref)))
        assert err <= 5e-2 + 5e-2 * scale, f"mismatch: max abs err {err} (ref max {scale})"

    print("KERNEL_OK")
</pallas_src>

<mosaic_0001>
module attributes {stable_mosaic.version = 11 : i64} {
  func.func @kernel(%arg0: i32, %arg1: i32, %arg2: memref<1x16x128xbf16, #tpu.memory_space<vmem>>, %arg3: memref<128x256xbf16, #tpu.memory_space<vmem>>, %arg4: memref<1x256xf32, #tpu.memory_space<vmem>>, %arg5: memref<9x256xf32, #tpu.memory_space<vmem>>, %arg6: memref<1x256xf32, #tpu.memory_space<vmem>>, %arg7: memref<256x128xbf16, #tpu.memory_space<vmem>>, %arg8: memref<1x128xf32, #tpu.memory_space<vmem>>, %arg9: memref<128x2xf32, #tpu.memory_space<vmem>>, %arg10: memref<1x2xf32, #tpu.memory_space<vmem>>, %arg11: memref<2x8xf32, #tpu.memory_space<vmem>>, %arg12: memref<1x8xf32, #tpu.memory_space<vmem>>, %arg13: memref<1x16x128xf32, #tpu.memory_space<vmem>>) attributes {dimension_semantics = [#tpu.dimension_semantics<parallel>, #tpu.dimension_semantics<parallel>], iteration_bounds = array<i64: 2, 1>, scalar_prefetch = 0 : i64, scratch_operands = 0 : i64, tpu.core_type = #tpu.core_type<tc>, window_params = [{transform_indices = @transform_0, window_bounds = array<i64: 1, 16, 128>}, {pipeline_mode = #tpu.pipeline_mode<synchronous>, transform_indices = @transform_1, window_bounds = array<i64: 128, 256>}, {pipeline_mode = #tpu.pipeline_mode<synchronous>, transform_indices = @transform_2, window_bounds = array<i64: 1, 256>}, {pipeline_mode = #tpu.pipeline_mode<synchronous>, transform_indices = @transform_3, window_bounds = array<i64: 9, 256>}, {pipeline_mode = #tpu.pipeline_mode<synchronous>, transform_indices = @transform_4, window_bounds = array<i64: 1, 256>}, {pipeline_mode = #tpu.pipeline_mode<synchronous>, transform_indices = @transform_5, window_bounds = array<i64: 256, 128>}, {pipeline_mode = #tpu.pipeline_mode<synchronous>, transform_indices = @transform_6, window_bounds = array<i64: 1, 128>}, {pipeline_mode = #tpu.pipeline_mode<synchronous>, transform_indices = @transform_7, window_bounds = array<i64: 128, 2>}, {pipeline_mode = #tpu.pipeline_mode<synchronous>, transform_indices = @transform_8, window_bounds = array<i64: 1, 2>}, {pipeline_mode = #tpu.pipeline_mode<synchronous>, transform_indices = @transform_9, window_bounds = array<i64: 2, 8>}, {pipeline_mode = #tpu.pipeline_mode<synchronous>, transform_indices = @transform_10, window_bounds = array<i64: 1, 8>}, {transform_indices = @transform_11, window_bounds = array<i64: 1, 16, 128>}]} {
    %c0 = arith.constant 0 : index
    %c0_0 = arith.constant 0 : index
    %c0_1 = arith.constant 0 : index
    %0 = vector.load %arg2[%c0, %c0_0, %c0_1] : memref<1x16x128xbf16, #tpu.memory_space<vmem>>, vector<1x16x128xbf16>
    %1 = vector.shape_cast %0 : vector<1x16x128xbf16> to vector<16x128xbf16>
    %c0_2 = arith.constant 0 : index
    %c0_3 = arith.constant 0 : index
    %2 = vector.load %arg3[%c0_2, %c0_3] : memref<128x256xbf16, #tpu.memory_space<vmem>>, vector<128x256xbf16>
    %cst = arith.constant dense<0.000000e+00> : vector<16x256xf32>
    %3 = tpu.matmul %1, %2, %cst {dimension_numbers = #tpu.dot_dimension_numbers<[1], [0], [0], [1], [0, 0, 1, 1], [], []>} : vector<16x128xbf16>, vector<128x256xbf16>, vector<16x256xf32> -> vector<16x256xf32>
    %c0_4 = arith.constant 0 : index
    %c0_5 = arith.constant 0 : index
    %4 = vector.load %arg4[%c0_4, %c0_5] : memref<1x256xf32, #tpu.memory_space<vmem>>, vector<1x256xf32>
    %5 = vector.broadcast %4 : vector<1x256xf32> to vector<16x256xf32>
    %6 = arith.addf %3, %5 : vector<16x256xf32>
    %7 = arith.negf %6 : vector<16x256xf32>
    %8 = math.exp %7 : vector<16x256xf32>
    %cst_6 = arith.constant 1.000000e+00 : f32
    %9 = vector.broadcast %cst_6 : f32 to vector<16x256xf32>
    %10 = arith.addf %9, %8 : vector<16x256xf32>
    %11 = arith.divf %9, %10 : vector<16x256xf32>
    %12 = arith.mulf %6, %11 : vector<16x256xf32>
    %cst_7 = arith.constant 0.000000e+00 : f32
    %13 = vector.broadcast %cst_7 : f32 to vector<1x256xf32>
    %14 = tpu.concatenate %13, %12, %13 in 0 : vector<1x256xf32>, vector<16x256xf32>, vector<1x256xf32> -> vector<18x256xf32>
    %c0_8 = arith.constant 0 : index
    %c0_9 = arith.constant 0 : index
    %15 = vector.load %arg5[%c0_8, %c0_9] : memref<9x256xf32, #tpu.memory_space<vmem>>, vector<9x256xf32>
    %cst_10 = arith.constant 0.000000e+00 : f32
    %16 = vector.broadcast %cst_10 : f32 to vector<16x256xf32>
    %17 = vector.extract_strided_slice %14 {offsets = [0, 240], sizes = [18, 16], strides = [1, 1]} : vector<18x256xf32> to vector<18x16xf32>
    %18 = vector.extract_strided_slice %14 {offsets = [0, 0], sizes = [18, 240], strides = [1, 1]} : vector<18x256xf32> to vector<18x240xf32>
    %19 = tpu.concatenate %17, %18 in 1 : vector<18x16xf32>, vector<18x240xf32> -> vector<18x256xf32>
    %20 = vector.extract_strided_slice %19 {offsets = [0, 0], sizes = [16, 256], strides = [1, 1]} : vector<18x256xf32> to vector<16x256xf32>
    %21 = vector.extract_strided_slice %15 {offsets = [0, 0], sizes = [1, 256], strides = [1, 1]} : vector<9x256xf32> to vector<1x256xf32>
    %22 = vector.broadcast %21 : vector<1x256xf32> to vector<16x256xf32>
    %23 = arith.mulf %20, %22 : vector<16x256xf32>
    %24 = arith.addf %16, %23 : vector<16x256xf32>
    %25 = vector.extract_strided_slice %19 {offsets = [1, 0], sizes = [16, 256], strides = [1, 1]} : vector<18x256xf32> to vector<16x256xf32>
    %26 = vector.extract_strided_slice %15 {offsets = [3, 0], sizes = [1, 256], strides = [1, 1]} : vector<9x256xf32> to vector<1x256xf32>
    %27 = vector.broadcast %26 : vector<1x256xf32> to vector<16x256xf32>
    %28 = arith.mulf %25, %27 : vector<16x256xf32>
    %29 = arith.addf %24, %28 : vector<16x256xf32>
    %30 = vector.extract_strided_slice %19 {offsets = [2, 0], sizes = [16, 256], strides = [1, 1]} : vector<18x256xf32> to vector<16x256xf32>
    %31 = vector.extract_strided_slice %15 {offsets = [6, 0], sizes = [1, 256], strides = [1, 1]} : vector<9x256xf32> to vector<1x256xf32>
    %32 = vector.broadcast %31 : vector<1x256xf32> to vector<16x256xf32>
    %33 = arith.mulf %30, %32 : vector<16x256xf32>
    %34 = arith.addf %29, %33 : vector<16x256xf32>
    %35 = vector.extract_strided_slice %14 {offsets = [0, 0], sizes = [16, 256], strides = [1, 1]} : vector<18x256xf32> to vector<16x256xf32>
    %36 = vector.extract_strided_slice %15 {offsets = [1, 0], sizes = [1, 256], strides = [1, 1]} : vector<9x256xf32> to vector<1x256xf32>
    %37 = vector.broadcast %36 : vector<1x256xf32> to vector<16x256xf32>
    %38 = arith.mulf %35, %37 : vector<16x256xf32>
    %39 = arith.addf %34, %38 : vector<16x256xf32>
    %40 = vector.extract_strided_slice %14 {offsets = [1, 0], sizes = [16, 256], strides = [1, 1]} : vector<18x256xf32> to vector<16x256xf32>
    %41 = vector.extract_strided_slice %15 {offsets = [4, 0], sizes = [1, 256], strides = [1, 1]} : vector<9x256xf32> to vector<1x256xf32>
    %42 = vector.broadcast %41 : vector<1x256xf32> to vector<16x256xf32>
    %43 = arith.mulf %40, %42 : vector<16x256xf32>
    %44 = arith.addf %39, %43 : vector<16x256xf32>
    %45 = vector.extract_strided_slice %14 {offsets = [2, 0], sizes = [16, 256], strides = [1, 1]} : vector<18x256xf32> to vector<16x256xf32>
    %46 = vector.extract_strided_slice %15 {offsets = [7, 0], sizes = [1, 256], strides = [1, 1]} : vector<9x256xf32> to vector<1x256xf32>
    %47 = vector.broadcast %46 : vector<1x256xf32> to vector<16x256xf32>
    %48 = arith.mulf %45, %47 : vector<16x256xf32>
    %49 = arith.addf %44, %48 : vector<16x256xf32>
    %50 = vector.extract_strided_slice %14 {offsets = [0, 16], sizes = [18, 240], strides = [1, 1]} : vector<18x256xf32> to vector<18x240xf32>
    %51 = vector.extract_strided_slice %14 {offsets = [0, 0], sizes = [18, 16], strides = [1, 1]} : vector<18x256xf32> to vector<18x16xf32>
    %52 = tpu.concatenate %50, %51 in 1 : vector<18x240xf32>, vector<18x16xf32> -> vector<18x256xf32>
    %53 = vector.extract_strided_slice %52 {offsets = [0, 0], sizes = [16, 256], strides = [1, 1]} : vector<18x256xf32> to vector<16x256xf32>
    %54 = vector.extract_strided_slice %15 {offsets = [2, 0], sizes = [1, 256], strides = [1, 1]} : vector<9x256xf32> to vector<1x256xf32>
    %55 = vector.broadcast %54 : vector<1x256xf32> to vector<16x256xf32>
    %56 = arith.mulf %53, %55 : vector<16x256xf32>
    %57 = arith.addf %49, %56 : vector<16x256xf32>
    %58 = vector.extract_strided_slice %52 {offsets = [1, 0], sizes = [16, 256], strides = [1, 1]} : vector<18x256xf32> to vector<16x256xf32>
    %59 = vector.extract_strided_slice %15 {offsets = [5, 0], sizes = [1, 256], strides = [1, 1]} : vector<9x256xf32> to vector<1x256xf32>
    %60 = vector.broadcast %59 : vector<1x256xf32> to vector<16x256xf32>
    %61 = arith.mulf %58, %60 : vector<16x256xf32>
    %62 = arith.addf %57, %61 : vector<16x256xf32>
    %63 = vector.extract_strided_slice %52 {offsets = [2, 0], sizes = [16, 256], strides = [1, 1]} : vector<18x256xf32> to vector<16x256xf32>
    %64 = vector.extract_strided_slice %15 {offsets = [8, 0], sizes = [1, 256], strides = [1, 1]} : vector<9x256xf32> to vector<1x256xf32>
    %65 = vector.broadcast %64 : vector<1x256xf32> to vector<16x256xf32>
    %66 = arith.mulf %63, %65 : vector<16x256xf32>
    %67 = arith.addf %62, %66 : vector<16x256xf32>
    %c0_11 = arith.constant 0 : index
    %c0_12 = arith.constant 0 : index
    %68 = vector.load %arg6[%c0_11, %c0_12] : memref<1x256xf32, #tpu.memory_space<vmem>>, vector<1x256xf32>
    %69 = vector.broadcast %68 : vector<1x256xf32> to vector<16x256xf32>
    %70 = arith.addf %67, %69 : vector<16x256xf32>
    %71 = arith.negf %70 : vector<16x256xf32>
    %72 = math.exp %71 : vector<16x256xf32>
    %cst_13 = arith.constant 1.000000e+00 : f32
    %73 = vector.broadcast %cst_13 : f32 to vector<16x256xf32>
    %74 = arith.addf %73, %72 : vector<16x256xf32>
    %75 = arith.divf %73, %74 : vector<16x256xf32>
    %76 = arith.mulf %70, %75 : vector<16x256xf32>
    %77 = arith.truncf %76 : vector<16x256xf32> to vector<16x256xbf16>
    %c0_14 = arith.constant 0 : index
    %c0_15 = arith.constant 0 : index
    %78 = vector.load %arg7[%c0_14, %c0_15] : memref<256x128xbf16, #tpu.memory_space<vmem>>, vector<256x128xbf16>
    %cst_16 = arith.constant dense<0.000000e+00> : vector<16x128xf32>
    %79 = tpu.matmul %77, %78, %cst_16 {dimension_numbers = #tpu.dot_dimension_numbers<[1], [0], [0], [1], [0, 0, 1, 1], [], []>} : vector<16x256xbf16>, vector<256x128xbf16>, vector<16x128xf32> -> vector<16x128xf32>
    %c0_17 = arith.constant 0 : index
    %c0_18 = arith.constant 0 : index
    %80 = vector.load %arg8[%c0_17, %c0_18] : memref<1x128xf32, #tpu.memory_space<vmem>>, vector<1x128xf32>
    %81 = vector.broadcast %80 : vector<1x128xf32> to vector<16x128xf32>
    %82 = arith.addf %79, %81 : vector<16x128xf32>
    %cst_19 = arith.constant dense<0.000000e+00> : vector<128xf32>
    %83 = vector.multi_reduction <add>, %82, %cst_19 [0] : vector<16x128xf32> to vector<128xf32>
    %84 = vector.shape_cast %83 : vector<128xf32> to vector<1x128xf32>
    %c0_20 = arith.constant 0 : index
    %c0_21 = arith.constant 0 : index
    %85 = vector.load %arg9[%c0_20, %c0_21] : memref<128x2xf32, #tpu.memory_space<vmem>>, vector<128x2xf32>
    %cst_22 = arith.constant dense<0.000000e+00> : vector<1x2xf32>
    %86 = tpu.matmul %84, %85, %cst_22 {dimension_numbers = #tpu.dot_dimension_numbers<[1], [0], [0], [1], [0, 0, 1, 1], [], []>} : vector<1x128xf32>, vector<128x2xf32>, vector<1x2xf32> -> vector<1x2xf32>
    %c0_23 = arith.constant 0 : index
    %c0_24 = arith.constant 0 : index
    %87 = vector.load %arg10[%c0_23, %c0_24] : memref<1x2xf32, #tpu.memory_space<vmem>>, vector<1x2xf32>
    %88 = arith.addf %86, %87 : vector<1x2xf32>
    %cst_25 = arith.constant 0.000000e+00 : f32
    %89 = vector.broadcast %cst_25 : f32 to vector<1x2xf32>
    %90 = arith.maximumf %88, %89 : vector<1x2xf32>
    %c0_26 = arith.constant 0 : index
    %c0_27 = arith.constant 0 : index
    %91 = vector.load %arg11[%c0_26, %c0_27] : memref<2x8xf32, #tpu.memory_space<vmem>>, vector<2x8xf32>
    %cst_28 = arith.constant dense<0.000000e+00> : vector<1x8xf32>
    %92 = tpu.matmul %90, %91, %cst_28 {dimension_numbers = #tpu.dot_dimension_numbers<[1], [0], [0], [1], [0, 0, 1, 1], [], []>} : vector<1x2xf32>, vector<2x8xf32>, vector<1x8xf32> -> vector<1x8xf32>
    %c0_29 = arith.constant 0 : index
    %c0_30 = arith.constant 0 : index
    %93 = vector.load %arg12[%c0_29, %c0_30] : memref<1x8xf32, #tpu.memory_space<vmem>>, vector<1x8xf32>
    %94 = arith.addf %92, %93 : vector<1x8xf32>
    %95 = arith.negf %94 : vector<1x8xf32>
    %96 = math.exp %95 : vector<1x8xf32>
    %cst_31 = arith.constant 1.000000e+00 : f32
    %97 = vector.broadcast %cst_31 : f32 to vector<1x8xf32>
    %98 = arith.addf %97, %96 : vector<1x8xf32>
    %99 = arith.divf %97, %98 : vector<1x8xf32>
    %100 = tpu.concatenate %99, %99, %99, %99, %99, %99, %99, %99, %99, %99, %99, %99, %99, %99, %99, %99 in 1 : vector<1x8xf32>, vector<1x8xf32>, vector<1x8xf32>, vector<1x8xf32>, vector<1x8xf32>, vector<1x8xf32>, vector<1x8xf32>, vector<1x8xf32>, vector<1x8xf32>, vector<1x8xf32>, vector<1x8xf32>, vector<1x8xf32>, vector<1x8xf32>, vector<1x8xf32>, vector<1x8xf32>, vector<1x8xf32> -> vector<1x128xf32>
    %101 = vector.broadcast %100 : vector<1x128xf32> to vector<16x128xf32>
    %102 = arith.mulf %82, %101 : vector<16x128xf32>
    %103 = arith.extf %1 : vector<16x128xbf16> to vector<16x128xf32>
    %104 = arith.addf %102, %103 : vector<16x128xf32>
    %105 = vector.shape_cast %104 : vector<16x128xf32> to vector<1x16x128xf32>
    %c0_32 = arith.constant 0 : index
    %c0_33 = arith.constant 0 : index
    %c0_34 = arith.constant 0 : index
    %106 = vector.load %arg13[%c0_32, %c0_33, %c0_34] : memref<1x16x128xf32, #tpu.memory_space<vmem>>, vector<1x16x128xf32>
    tpu.vector_store %arg13[%c0_32, %c0_33, %c0_34], %105 {strides = array<i32>} : memref<1x16x128xf32, #tpu.memory_space<vmem>>, vector<1x16x128xf32>,
    return
  }
  func.func @transform_0(%arg0: i32, %arg1: i32) -> (i32, i32, i32) {
    %c0_i32 = arith.constant 0 : i32
    %c0_i32_0 = arith.constant 0 : i32
    %c0_i32_1 = arith.constant 0 : i32
    return %arg0, %c0_i32, %c0_i32_0 : i32, i32, i32
  }
  func.func @transform_1(%arg0: i32, %arg1: i32) -> (i32, i32) {
    %c0_i32 = arith.constant 0 : i32
    %c0_i32_0 = arith.constant 0 : i32
    %c0_i32_1 = arith.constant 0 : i32
    return %c0_i32, %c0_i32_0 : i32, i32
  }
  func.func @transform_2(%arg0: i32, %arg1: i32) -> (i32, i32) {
    %c0_i32 = arith.constant 0 : i32
    %c0_i32_0 = arith.constant 0 : i32
    %c0_i32_1 = arith.constant 0 : i32
    return %c0_i32, %c0_i32_0 : i32, i32
  }
  func.func @transform_3(%arg0: i32, %arg1: i32) -> (i32, i32) {
    %c0_i32 = arith.constant 0 : i32
    %c0_i32_0 = arith.constant 0 : i32
    %c0_i32_1 = arith.constant 0 : i32
    return %c0_i32, %c0_i32_0 : i32, i32
  }
  func.func @transform_4(%arg0: i32, %arg1: i32) -> (i32, i32) {
    %c0_i32 = arith.constant 0 : i32
    %c0_i32_0 = arith.constant 0 : i32
    %c0_i32_1 = arith.constant 0 : i32
    return %c0_i32, %c0_i32_0 : i32, i32
  }
  func.func @transform_5(%arg0: i32, %arg1: i32) -> (i32, i32) {
    %c0_i32 = arith.constant 0 : i32
    %c0_i32_0 = arith.constant 0 : i32
    %c0_i32_1 = arith.constant 0 : i32
    return %c0_i32, %c0_i32_0 : i32, i32
  }
  func.func @transform_6(%arg0: i32, %arg1: i32) -> (i32, i32) {
    %c0_i32 = arith.constant 0 : i32
    %c0_i32_0 = arith.constant 0 : i32
    %c0_i32_1 = arith.constant 0 : i32
    return %c0_i32, %c0_i32_0 : i32, i32
  }
  func.func @transform_7(%arg0: i32, %arg1: i32) -> (i32, i32) {
    %c0_i32 = arith.constant 0 : i32
    %c0_i32_0 = arith.constant 0 : i32
    %c0_i32_1 = arith.constant 0 : i32
    return %c0_i32, %c0_i32_0 : i32, i32
  }
  func.func @transform_8(%arg0: i32, %arg1: i32) -> (i32, i32) {
    %c0_i32 = arith.constant 0 : i32
    %c0_i32_0 = arith.constant 0 : i32
    %c0_i32_1 = arith.constant 0 : i32
    return %c0_i32, %c0_i32_0 : i32, i32
  }
  func.func @transform_9(%arg0: i32, %arg1: i32) -> (i32, i32) {
    %c0_i32 = arith.constant 0 : i32
    %c0_i32_0 = arith.constant 0 : i32
    %c0_i32_1 = arith.constant 0 : i32
    return %c0_i32, %c0_i32_0 : i32, i32
  }
  func.func @transform_10(%arg0: i32, %arg1: i32) -> (i32, i32) {
    %c0_i32 = arith.constant 0 : i32
    %c0_i32_0 = arith.constant 0 : i32
    %c0_i32_1 = arith.constant 0 : i32
    return %c0_i32, %c0_i32_0 : i32, i32
  }
  func.func @transform_11(%arg0: i32, %arg1: i32) -> (i32, i32, i32) {
    %c0_i32 = arith.constant 0 : i32
    %c0_i32_0 = arith.constant 0 : i32
    return %arg0, %arg1, %c0_i32 : i32, i32, i32
  }
}

</mosaic_0001>

<llo_original>
// kernel: mul.129
$region0: #{mul.129}
  #allocation0 [shape = 's32[1]{0}', space=sflag, size = 0x4, scoped, tag = 'scoped memory for mul.129']
  %s0 = inlined_call_operand.vmem [shape: f32[16], index: 0, kind: input, shape index: {}]
  %s1 = inlined_call_operand.vmem [shape: f32[16,16], index: 1, kind: output, shape index: {}]
  // Predicated region
  $region2: #{mul.129} parent=0 // pred_check
    _
  $region3: #{mul.129} parent=0 // pred_check_branch
    %3 = sbr.rel (0) target = $region5
  $region4: #{mul.129} parent=0 // pred_region
    _
  $region5: #{mul.129} parent=0 // pred_fallthru
    _
  %v4 = vld [vmem:[%s0] ss:$0 sm:$0xff]
  %5 = vst [vmem:[%s1] sm:$0xff] %v4
  %s6 = scalar_lea.vmem %s1, 8
  %7 = vst [vmem:[%s6] sm:$0xff] %v4

// kernel: mobilenet_block.1
$region0: #{mobilenet_block.1}
  #allocation0 [shape = 'u32[]', space=smem, size = 0x4, offset = 0x4, fixed_abs, tag = 'smem constant byte address 0x4 - core index']
  #allocation1 [shape = 'u32[144,128]{1,0:T(1,128)}', space=vmem, size = 0x12000, scoped, tag = 'internal scratch']
  %s0 = inlined_call_operand.vmem [shape: bf16[2,16,128], index: 0, kind: input, shape index: {}]
  %s1 = inlined_call_operand.vmem [shape: bf16[128,256], index: 1, kind: input, shape index: {}]
  %s2 = inlined_call_operand.vmem [shape: f32[1,256], index: 2, kind: input, shape index: {}]
  %s3 = inlined_call_operand.vmem [shape: f32[9,256], index: 3, kind: input, shape index: {}]
  %s4 = inlined_call_operand.vmem [shape: f32[1,256], index: 4, kind: input, shape index: {}]
  %s5 = inlined_call_operand.vmem [shape: bf16[256,128], index: 5, kind: input, shape index: {}]
  %s6 = inlined_call_operand.vmem [shape: f32[1,128], index: 6, kind: input, shape index: {}]
  %s7 = inlined_call_operand.vmem [shape: f32[128,2], index: 7, kind: input, shape index: {}]
  %s8 = inlined_call_operand.vmem [shape: f32[1,2], index: 8, kind: input, shape index: {}]
  %s9 = inlined_call_operand.vmem [shape: f32[2,8], index: 9, kind: input, shape index: {}]
  %s10 = inlined_call_operand.vmem [shape: f32[1,8], index: 10, kind: input, shape index: {}]
  %s11 = inlined_call_operand.vmem [shape: f32[2,16,128], index: 11, kind: output, shape index: {}]
  %s12 = sld [smem:[#allocation0]]
  $region77: #{mobilenet_block.1} parent=0
    _
  %s14 = ssub.s32 1, %s12
  %s15 = scalar_select 0, %s14, %s12
  loop: start=0, step=1, limit=4
  $region2: #{mobilenet_block.1} parent=0 // loop_pre_header
    _
  $region3: #{mobilenet_block.1} parent=0 // loop_header
    %s17 = sphi 0, %s21
    %p18 = scmp.ge.s32.totalorder %s17, 4
    %s24 = sphi 0, %s36
    %s25 = sphi 0, %s32
    %s26 = sphi 0, %s24
    %s27 = sphi 0, %s25
    %s28 = sphi 0, %s26
    %s29 = sphi 0, %s27
    %s39 = sphi 0, %s41
    %s42 = sphi 0, %s39
    %s43 = sphi 0, %s42
    %s59 = sphi 0, %s43
    %s63 = sphi 0, %s63
    %s65 = sphi 0, %s63
    %s66 = sphi 0, %s65
    %s80 = sphi 0, %s66
    %s84 = sphi 0, %s84
    %s86 = sphi 0, %s84
    %s87 = sphi 0, %s86
    %s101 = sphi 0, %s87
    %s105 = sphi 0, %s105
    %s107 = sphi 0, %s105
    %s108 = sphi 0, %s107
    %s122 = sphi 0, %s108
    %s126 = sphi 0, %s126
    %s128 = sphi 0, %s126
    %s129 = sphi 0, %s128
    %s143 = sphi 0, %s129
    %s147 = sphi 0, %s147
    %s149 = sphi 0, %s147
    %s150 = sphi 0, %s149
    %s164 = sphi 0, %s150
    %s168 = sphi 0, %s168
    %s170 = sphi 0, %s168
    %s171 = sphi 0, %s170
    %s185 = sphi 0, %s171
    %s189 = sphi 0, %s189
    %s191 = sphi 0, %s189
    %s192 = sphi 0, %s191
    %s206 = sphi 0, %s192
    %s210 = sphi 0, %s210
    %s212 = sphi 0, %s210
    %s213 = sphi 0, %s212
    %s227 = sphi 0, %s213
    %s231 = sphi 0, %s231
    %s233 = sphi 0, %s231
    %s234 = sphi 0, %s233
    %s248 = sphi 0, %s234
    %s252 = sphi 0, %s252
    %s254 = sphi 0, %s252
    %s255 = sphi 0, %s254
    %s269 = sphi 0, %s255
    %s277 = sphi 0, %s279
    %s280 = sphi 0, %s277
    %s281 = sphi 0, %s280
    %s297 = sphi 0, %s281
  $region4: #{mobilenet_block.1} parent=0 // loop_header_branch
    %20 = sbr.rel (%p18) target = $region8
  $region5: #{mobilenet_block.1} parent=0 // loop_body
    %s22 = ssub.s32 %s17, 1
    %s23 = ssub.s32 %s17, 2
    %s30 = sadd.s32 1, %s25
    %p31 = scmp.ge.s32.totalorder %s30, 1
    %s32 = scalar_select %p31, 0, %s30
    %s33 = sadd.s32 1, %s24
    %s34 = scalar_select %p31, %s33, %s24
    %p35 = scmp.ge.s32.totalorder %s34, 2
    %s36 = scalar_select %p35, 0, %s34
    %s37 = ssub.s32 %s24, %s36
    %p38 = scmp.eq.s32.totalorder %s37, 0
    %s40 = sadd.s32 %s39, 1
    %s41 = scalar_select %p38, %s39, %s40
    %p44 = pneg %p38
    %p45 = scmp.eq.s32.totalorder %s17, 1
    %p46 = por %p44, %p45
    %p47 = scmp.ne.s32.totalorder %s39, %s42
    %p48 = scmp.eq.s32.totalorder %s17, 0
    %p49 = por %p47, %p48
    %p50 = scmp.ne.s32.totalorder %s39, %s42
    %p51 = scmp.eq.s32.totalorder %s22, 1
    %p52 = por %p50, %p51
    %p53 = scmp.ne.s32.totalorder %s42, %s43
    %p54 = scmp.eq.s32.totalorder %s22, 0
    %p55 = por %p53, %p54
    %p56 = scmp.ne.s32.totalorder %s42, %s43
    %p57 = scmp.eq.s32.totalorder %s23, 1
    %p58 = por %p56, %p57
    %p60 = scmp.ne.s32.totalorder %s43, %s59
    %p61 = scmp.eq.s32.totalorder %s23, 0
    %p62 = por %p60, %p61
    %s64 = sadd.s32 %s63, 1
    %p67 = scmp.eq.s32.totalorder %s17, 1
    %p68 = scmp.ne.s32.totalorder %s63, %s65
    %p69 = scmp.eq.s32.totalorder %s17, 0
    %p70 = por %p68, %p69
    %p71 = scmp.ne.s32.totalorder %s63, %s65
    %p72 = scmp.eq.s32.totalorder %s22, 1
    %p73 = por %p71, %p72
    %p74 = scmp.ne.s32.totalorder %s65, %s66
    %p75 = scmp.eq.s32.totalorder %s22, 0
    %p76 = por %p74, %p75
    %p77 = scmp.ne.s32.totalorder %s65, %s66
    %p78 = scmp.eq.s32.totalorder %s23, 1
    %p79 = por %p77, %p78
    %p81 = scmp.ne.s32.totalorder %s66, %s80
    %p82 = scmp.eq.s32.totalorder %s23, 0
    %p83 = por %p81, %p82
    %s85 = sadd.s32 %s84, 1
    %p88 = scmp.eq.s32.totalorder %s17, 1
    %p89 = scmp.ne.s32.totalorder %s84, %s86
    %p90 = scmp.eq.s32.totalorder %s17, 0
    %p91 = por %p89, %p90
    %p92 = scmp.ne.s32.totalorder %s84, %s86
    %p93 = scmp.eq.s32.totalorder %s22, 1
    %p94 = por %p92, %p93
    %p95 = scmp.ne.s32.totalorder %s86, %s87
    %p96 = scmp.eq.s32.totalorder %s22, 0
    %p97 = por %p95, %p96
    %p98 = scmp.ne.s32.totalorder %s86, %s87
    %p99 = scmp.eq.s32.totalorder %s23, 1
    %p100 = por %p98, %p99
    %p102 = scmp.ne.s32.totalorder %s87, %s101
    %p103 = scmp.eq.s32.totalorder %s23, 0
    %p104 = por %p102, %p103
    %s106 = sadd.s32 %s105, 1
    %p109 = scmp.eq.s32.totalorder %s17, 1
    %p110 = scmp.ne.s32.totalorder %s105, %s107
    %p111 = scmp.eq.s32.totalorder %s17, 0
    %p112 = por %p110, %p111
    %p113 = scmp.ne.s32.totalorder %s105, %s107
    %p114 = scmp.eq.s32.totalorder %s22, 1
    %p115 = por %p113, %p114
    %p116 = scmp.ne.s32.totalorder %s107, %s108
    %p117 = scmp.eq.s32.totalorder %s22, 0
    %p118 = por %p116, %p117
    %p119 = scmp.ne.s32.totalorder %s107, %s108
    %p120 = scmp.eq.s32.totalorder %s23, 1
    %p121 = por %p119, %p120
    %p123 = scmp.ne.s32.totalorder %s108, %s122
    %p124 = scmp.eq.s32.totalorder %s23, 0
    %p125 = por %p123, %p124
    %s127 = sadd.s32 %s126, 1
    %p130 = scmp.eq.s32.totalorder %s17, 1
    %p131 = scmp.ne.s32.totalorder %s126, %s128
    %p132 = scmp.eq.s32.totalorder %s17, 0
    %p133 = por %p131, %p132
    %p134 = scmp.ne.s32.totalorder %s126, %s128
    %p135 = scmp.eq.s32.totalorder %s22, 1
    %p136 = por %p134, %p135
    %p137 = scmp.ne.s32.totalorder %s128, %s129
    %p138 = scmp.eq.s32.totalorder %s22, 0
    %p139 = por %p137, %p138
    %p140 = scmp.ne.s32.totalorder %s128, %s129
    %p141 = scmp.eq.s32.totalorder %s23, 1
    %p142 = por %p140, %p141
    %p144 = scmp.ne.s32.totalorder %s129, %s143
    %p145 = scmp.eq.s32.totalorder %s23, 0
    %p146 = por %p144, %p145
    %s148 = sadd.s32 %s147, 1
    %p151 = scmp.eq.s32.totalorder %s17, 1
    %p152 = scmp.ne.s32.totalorder %s147, %s149
    %p153 = scmp.eq.s32.totalorder %s17, 0
    %p154 = por %p152, %p153
    %p155 = scmp.ne.s32.totalorder %s147, %s149
    %p156 = scmp.eq.s32.totalorder %s22, 1
    %p157 = por %p155, %p156
    %p158 = scmp.ne.s32.totalorder %s149, %s150
    %p159 = scmp.eq.s32.totalorder %s22, 0
    %p160 = por %p158, %p159
    %p161 = scmp.ne.s32.totalorder %s149, %s150
    %p162 = scmp.eq.s32.totalorder %s23, 1
    %p163 = por %p161, %p162
    %p165 = scmp.ne.s32.totalorder %s150, %s164
    %p166 = scmp.eq.s32.totalorder %s23, 0
    %p167 = por %p165, %p166
    %s169 = sadd.s32 %s168, 1
    %p172 = scmp.eq.s32.totalorder %s17, 1
    %p173 = scmp.ne.s32.totalorder %s168, %s170
    %p174 = scmp.eq.s32.totalorder %s17, 0
    %p175 = por %p173, %p174
    %p176 = scmp.ne.s32.totalorder %s168, %s170
    %p177 = scmp.eq.s32.totalorder %s22, 1
    %p178 = por %p176, %p177
    %p179 = scmp.ne.s32.totalorder %s170, %s171
    %p180 = scmp.eq.s32.totalorder %s22, 0
    %p181 = por %p179, %p180
    %p182 = scmp.ne.s32.totalorder %s170, %s171
    %p183 = scmp.eq.s32.totalorder %s23, 1
    %p184 = por %p182, %p183
    %p186 = scmp.ne.s32.totalorder %s171, %s185
    %p187 = scmp.eq.s32.totalorder %s23, 0
    %p188 = por %p186, %p187
    %s190 = sadd.s32 %s189, 1
    %p193 = scmp.eq.s32.totalorder %s17, 1
    %p194 = scmp.ne.s32.totalorder %s189, %s191
    %p195 = scmp.eq.s32.totalorder %s17, 0
    %p196 = por %p194, %p195
    %p197 = scmp.ne.s32.totalorder %s189, %s191
    %p198 = scmp.eq.s32.totalorder %s22, 1
    %p199 = por %p197, %p198
    %p200 = scmp.ne.s32.totalorder %s191, %s192
    %p201 = scmp.eq.s32.totalorder %s22, 0
    %p202 = por %p200, %p201
    %p203 = scmp.ne.s32.totalorder %s191, %s192
    %p204 = scmp.eq.s32.totalorder %s23, 1
    %p205 = por %p203, %p204
    %p207 = scmp.ne.s32.totalorder %s192, %s206
    %p208 = scmp.eq.s32.totalorder %s23, 0
    %p209 = por %p207, %p208
    %s211 = sadd.s32 %s210, 1
    %p214 = scmp.eq.s32.totalorder %s17, 1
    %p215 = scmp.ne.s32.totalorder %s210, %s212
    %p216 = scmp.eq.s32.totalorder %s17, 0
    %p217 = por %p215, %p216
    %p218 = scmp.ne.s32.totalorder %s210, %s212
    %p219 = scmp.eq.s32.totalorder %s22, 1
    %p220 = por %p218, %p219
    %p221 = scmp.ne.s32.totalorder %s212, %s213
    %p222 = scmp.eq.s32.totalorder %s22, 0
    %p223 = por %p221, %p222
    %p224 = scmp.ne.s32.totalorder %s212, %s213
    %p225 = scmp.eq.s32.totalorder %s23, 1
    %p226 = por %p224, %p225
    %p228 = scmp.ne.s32.totalorder %s213, %s227
    %p229 = scmp.eq.s32.totalorder %s23, 0
    %p230 = por %p228, %p229
    %s232 = sadd.s32 %s231, 1
    %p235 = scmp.eq.s32.totalorder %s17, 1
    %p236 = scmp.ne.s32.totalorder %s231, %s233
    %p237 = scmp.eq.s32.totalorder %s17, 0
    %p238 = por %p236, %p237
    %p239 = scmp.ne.s32.totalorder %s231, %s233
    %p240 = scmp.eq.s32.totalorder %s22, 1
    %p241 = por %p239, %p240
    %p242 = scmp.ne.s32.totalorder %s233, %s234
    %p243 = scmp.eq.s32.totalorder %s22, 0
    %p244 = por %p242, %p243
    %p245 = scmp.ne.s32.totalorder %s233, %s234
    %p246 = scmp.eq.s32.totalorder %s23, 1
    %p247 = por %p245, %p246
    %p249 = scmp.ne.s32.totalorder %s234, %s248
    %p250 = scmp.eq.s32.totalorder %s23, 0
    %p251 = por %p249, %p250
    %s253 = sadd.s32 %s252, 1
    %p256 = scmp.eq.s32.totalorder %s17, 1
    %p257 = scmp.ne.s32.totalorder %s252, %s254
    %p258 = scmp.eq.s32.totalorder %s17, 0
    %p259 = por %p257, %p258
    %p260 = scmp.ne.s32.totalorder %s252, %s254
    %p261 = scmp.eq.s32.totalorder %s22, 1
    %p262 = por %p260, %p261
    %p263 = scmp.ne.s32.totalorder %s254, %s255
    %p264 = scmp.eq.s32.totalorder %s22, 0
    %p265 = por %p263, %p264
    %p266 = scmp.ne.s32.totalorder %s254, %s255
    %p267 = scmp.eq.s32.totalorder %s23, 1
    %p268 = por %p266, %p267
    %p270 = scmp.ne.s32.totalorder %s255, %s269
    %p271 = scmp.eq.s32.totalorder %s23, 0
    %p272 = por %p270, %p271
    %s273 = ssub.s32 %s24, %s36
    %s274 = ssub.s32 %s25, %s32
    %s275 = sor.u32 %s273, %s274
    %p276 = scmp.eq.s32.totalorder %s275, 0
    %s278 = sadd.s32 %s277, 1
    %s279 = scalar_select %p276, %s277, %s278
    %p282 = pneg %p276
    %p283 = scmp.eq.s32.totalorder %s17, 1
    %p284 = por %p282, %p283
    %p285 = scmp.ne.s32.totalorder %s277, %s280
    %p286 = scmp.eq.s32.totalorder %s17, 0
    %p287 = por %p285, %p286
    %p288 = scmp.ne.s32.totalorder %s277, %s280
    %p289 = scmp.eq.s32.totalorder %s22, 1
    %p290 = por %p288, %p289
    %p291 = scmp.ne.s32.totalorder %s280, %s281
    %p292 = scmp.eq.s32.totalorder %s22, 0
    %p293 = por %p291, %p292
    %p294 = scmp.ne.s32.totalorder %s280, %s281
    %p295 = scmp.eq.s32.totalorder %s23, 1
    %p296 = por %p294, %p295
    %p298 = scmp.ne.s32.totalorder %s281, %s297
    %p299 = scmp.eq.s32.totalorder %s23, 0
    %p300 = por %p298, %p299
    %p301 = scmp.le.s32.totalorder 1, %s17
    %p302 = scmp.lt.s32.totalorder %s17, 3
    %p303 = pnand %p301, %p302
    %p304 = pneg %p303
    // Predicated region
    $region9: #{mobilenet_block.1} parent=5 // pred_check
      _
    $region10: #{mobilenet_block.1} parent=5 // pred_check_branch
      %306 = sbr.rel (%p303) target = $region12
    $region11: #{mobilenet_block.1} parent=5 // pred_region
      %s307 = ssub.s32 %s17, 1
      // Predicated region
      $region13: #{mobilenet_block.1} parent=11 // pred_check
        %p308 = pneg %p76
      $region14: #{mobilenet_block.1} parent=11 // pred_check_branch
        %310 = sbr.rel (%p308) target = $region16
      $region15: #{mobilenet_block.1} parent=11 // pred_region
        _
      $region16: #{mobilenet_block.1} parent=11 // pred_fallthru
        _
      // Predicated region
      $region17: #{mobilenet_block.1} parent=11 // pred_check
        %p311 = pneg %p97
      $region18: #{mobilenet_block.1} parent=11 // pred_check_branch
        %313 = sbr.rel (%p311) target = $region20
      $region19: #{mobilenet_block.1} parent=11 // pred_region
        _
      $region20: #{mobilenet_block.1} parent=11 // pred_fallthru
        _
      // Predicated region
      $region21: #{mobilenet_block.1} parent=11 // pred_check
        %p314 = pneg %p118
      $region22: #{mobilenet_block.1} parent=11 // pred_check_branch
        %316 = sbr.rel (%p314) target = $region24
      $region23: #{mobilenet_block.1} parent=11 // pred_region
        _
      $region24: #{mobilenet_block.1} parent=11 // pred_fallthru
        _
      // Predicated region
      $region25: #{mobilenet_block.1} parent=11 // pred_check
        %p317 = pneg %p139
      $region26: #{mobilenet_block.1} parent=11 // pred_check_branch
        %319 = sbr.rel (%p317) target = $region28
      $region27: #{mobilenet_block.1} parent=11 // pred_region
        _
      $region28: #{mobilenet_block.1} parent=11 // pred_fallthru
        _
      // Predicated region
      $region29: #{mobilenet_block.1} parent=11 // pred_check
        %p320 = pneg %p160
      $region30: #{mobilenet_block.1} parent=11 // pred_check_branch
        %322 = sbr.rel (%p320) target = $region32
      $region31: #{mobilenet_block.1} parent=11 // pred_region
        _
      $region32: #{mobilenet_block.1} parent=11 // pred_fallthru
        _
      // Predicated region
      $region33: #{mobilenet_block.1} parent=11 // pred_check
        %p323 = pneg %p181
      $region34: #{mobilenet_block.1} parent=11 // pred_check_branch
        %325 = sbr.rel (%p323) target = $region36
      $region35: #{mobilenet_block.1} parent=11 // pred_region
        _
      $region36: #{mobilenet_block.1} parent=11 // pred_fallthru
        _
      // Predicated region
      $region37: #{mobilenet_block.1} parent=11 // pred_check
        %p326 = pneg %p202
      $region38: #{mobilenet_block.1} parent=11 // pred_check_branch
        %328 = sbr.rel (%p326) target = $region40
      $region39: #{mobilenet_block.1} parent=11 // pred_region
        _
      $region40: #{mobilenet_block.1} parent=11 // pred_fallthru
        _
      // Predicated region
      $region41: #{mobilenet_block.1} parent=11 // pred_check
        %p329 = pneg %p223
      $region42: #{mobilenet_block.1} parent=11 // pred_check_branch
        %331 = sbr.rel (%p329) target = $region44
      $region43: #{mobilenet_block.1} parent=11 // pred_region
        _
      $region44: #{mobilenet_block.1} parent=11 // pred_fallthru
        _
      // Predicated region
      $region45: #{mobilenet_block.1} parent=11 // pred_check
        %p332 = pneg %p244
      $region46: #{mobilenet_block.1} parent=11 // pred_check_branch
        %334 = sbr.rel (%p332) target = $region48
      $region47: #{mobilenet_block.1} parent=11 // pred_region
        _
      $region48: #{mobilenet_block.1} parent=11 // pred_fallthru
        _
      // Predicated region
      $region49: #{mobilenet_block.1} parent=11 // pred_check
        %p335 = pneg %p265
      $region50: #{mobilenet_block.1} parent=11 // pred_check_branch
        %337 = sbr.rel (%p335) target = $region52
      $region51: #{mobilenet_block.1} parent=11 // pred_region
        _
      $region52: #{mobilenet_block.1} parent=11 // pred_fallthru
        _
    $region12: #{mobilenet_block.1} parent=5 // pred_fallthru
      _
    %p338 = scmp.lt.s32.totalorder %s17, 2
    // Predicated region
    $region53: #{mobilenet_block.1} parent=5 // pred_check
      %p339 = pneg %p338
    $region54: #{mobilenet_block.1} parent=5 // pred_check_branch
      %341 = sbr.rel (%p339) target = $region56
    $region55: #{mobilenet_block.1} parent=5 // pred_region
      // Predicated region
      $region57: #{mobilenet_block.1} parent=55 // pred_check
        %p342 = pneg %p49
      $region58: #{mobilenet_block.1} parent=55 // pred_check_branch
        %344 = sbr.rel (%p342) target = $region60
      $region59: #{mobilenet_block.1} parent=55 // pred_region
        %p345 = scmp.lt.s32.totalorder %s24, 1
        %s346 = scalar_select %p345, %s24, 1
        %s347 = smul.addr %s346, 2
        %s348 = smul.addr %s347, 4
        %s349 = scalar_lea.vmem %s0, %s348
      $region60: #{mobilenet_block.1} parent=55 // pred_fallthru
        _
    $region56: #{mobilenet_block.1} parent=5 // pred_fallthru
      _
    %p350 = scmp.le.s32.totalorder 1, %s17
    %p351 = scmp.lt.s32.totalorder %s17, 3
    %p352 = pnand %p350, %p351
    %p353 = pneg %p352
    // Predicated region
    $region61: #{mobilenet_block.1} parent=5 // pred_check
      _
    $region62: #{mobilenet_block.1} parent=5 // pred_check_branch
      %355 = sbr.rel (%p352) target = $region64
    $region63: #{mobilenet_block.1} parent=5 // pred_region
      %s356 = ssub.s32 %s17, 1
      %p357 = scmp.lt.s32.totalorder %s26, 1
      %s358 = scalar_select %p357, %s26, 1
      %s359 = smul.addr %s358, 2
      %s360 = smul.addr %s359, 4
      %s361 = scalar_lea.vmem %s0, %s360
      %p362 = pneg %p55
      %p363 = pneg %p52
      %p364 = pneg %p76
      %p365 = pneg %p73
      %p366 = pneg %p97
      %p367 = pneg %p94
      %p368 = pneg %p118
      %p369 = pneg %p115
      %p370 = pneg %p139
      %p371 = pneg %p136
      %p372 = pneg %p160
      %p373 = pneg %p157
      %p374 = pneg %p181
      %p375 = pneg %p178
      %p376 = pneg %p202
      %p377 = pneg %p199
      %p378 = pneg %p223
      %p379 = pneg %p220
      %p380 = pneg %p244
      %p381 = pneg %p241
      %p382 = pneg %p265
      %p383 = pneg %p262
      %p384 = pneg %p293
      %p385 = pneg %p290
      %s386 = smul.u32 2, %s27
      %p387 = scmp.lt.s32.totalorder %s26, 1
      %s388 = scalar_select %p387, %s26, 1
      %p389 = scmp.lt.s32.totalorder %s386, 1
      %s390 = scalar_select %p389, %s386, 1
      %s391 = smul.addr %s388, 2
      %s392 = sadd.s32 %s390, %s391
      %s393 = smul.addr %s392, 8
      %s394 = scalar_lea.vmem %s11, %s393
      %p395 = scmp.lt.s32.totalorder %s26, 1
      %s396 = scalar_select %p395, %s26, 1
      %s397 = smul.addr %s396, 2
      %s398 = smul.addr %s397, 4
      %s399 = scalar_lea.vmem %s0, %s398
      %s400 = smul.u32 2, %s27
      %p401 = scmp.lt.s32.totalorder %s26, 1
      %s402 = scalar_select %p401, %s26, 1
      %p403 = scmp.lt.s32.totalorder %s400, 1
      %s404 = scalar_select %p403, %s400, 1
      %s405 = smul.addr %s402, 2
      %s406 = sadd.s32 %s404, %s405
      %s407 = smul.addr %s406, 8
      %s408 = scalar_lea.vmem %s11, %s407
      %s409 = smul.u32 2, %s27
      %v411 = vld [vmem:[%s399] sm:$0xf]
      %v412 = vld [vmem:[%s399 + $0x4] sm:$0xf]
      %v413 = vld [vmem:[%s1] sm:$0xff]
      %v414 = vld [vmem:[%s1 + $0x8] sm:$0xff]
      %v415 = vld [vmem:[%s1 + $0x10] sm:$0xff]
      %v416 = vld [vmem:[%s1 + $0x18] sm:$0xff]
      %v417 = vld [vmem:[%s1 + $0x20] sm:$0xff]
      %v418 = vld [vmem:[%s1 + $0x28] sm:$0xff]
      %v419 = vld [vmem:[%s1 + $0x30] sm:$0xff]
      %v420 = vld [vmem:[%s1 + $0x38] sm:$0xff]
      %v421 = vld [vmem:[%s1 + $0x40] sm:$0xff]
      %v422 = vld [vmem:[%s1 + $0x48] sm:$0xff]
      %v423 = vld [vmem:[%s1 + $0x50] sm:$0xff]
      %v424 = vld [vmem:[%s1 + $0x58] sm:$0xff]
      %v425 = vld [vmem:[%s1 + $0x60] sm:$0xff]
      %v426 = vld [vmem:[%s1 + $0x68] sm:$0xff]
      %v427 = vld [vmem:[%s1 + $0x70] sm:$0xff]
      %v428 = vld [vmem:[%s1 + $0x78] sm:$0xff]
      %v429 = vld [vmem:[%s2] sm:$0x3]
      %v431 = vlaneseq
      %v432 = vshrl.u32 %v431, 7
      %v433 = vsub.s32 0, %v432
      %v434 = vrot.slane %v429, %v433
      %v435 = vlaneseq
      %v436 = vshrl.u32 %v435, 7
      %v437 = vsub.s32 1, %v436
      %v438 = vrot.slane %v429, %v437
      %v443 = vunpack.c.l.b16 %v411
      %v444 = vunpack.c.l.b16 %v412
      %v445 = vpack.c.b16 %v444, %v443
      %v463 = vunpack.c.l.b16 %v413
      %v464 = vunpack.c.h.b16 %v413
      %v465 = vunpack.c.l.b16 %v414
      %v466 = vunpack.c.h.b16 %v414
      %v467 = vunpack.c.l.b16 %v415
      %v468 = vunpack.c.h.b16 %v415
      %v469 = vunpack.c.l.b16 %v416
      %v470 = vunpack.c.h.b16 %v416
      %v471 = vunpack.c.l.b16 %v417
      %v472 = vunpack.c.h.b16 %v417
      %v473 = vunpack.c.l.b16 %v418
      %v474 = vunpack.c.h.b16 %v418
      %v475 = vunpack.c.l.b16 %v419
      %v476 = vunpack.c.h.b16 %v419
      %v477 = vunpack.c.l.b16 %v420
      %v478 = vunpack.c.h.b16 %v420
      %v479 = vunpack.c.l.b16 %v421
      %v480 = vunpack.c.h.b16 %v421
      %v481 = vunpack.c.l.b16 %v422
      %v482 = vunpack.c.h.b16 %v422
      %v483 = vunpack.c.l.b16 %v423
      %v484 = vunpack.c.h.b16 %v423
      %v485 = vunpack.c.l.b16 %v424
      %v486 = vunpack.c.h.b16 %v424
      %v487 = vunpack.c.l.b16 %v425
      %v488 = vunpack.c.h.b16 %v425
      %v489 = vunpack.c.l.b16 %v426
      %v490 = vunpack.c.h.b16 %v426
      %v491 = vunpack.c.l.b16 %v427
      %v492 = vunpack.c.h.b16 %v427
      %v493 = vunpack.c.l.b16 %v428
      %v494 = vunpack.c.h.b16 %v428
      %v495 = vpack.c.b16 %v465, %v463
      %v496 = vpack.c.b16 %v466, %v464
      %v497 = vpack.c.b16 %v469, %v467
      %v498 = vpack.c.b16 %v470, %v468
      %v499 = vpack.c.b16 %v473, %v471
      %v500 = vpack.c.b16 %v474, %v472
      %v501 = vpack.c.b16 %v477, %v475
      %v502 = vpack.c.b16 %v478, %v476
      %v503 = vpack.c.b16 %v481, %v479
      %v504 = vpack.c.b16 %v482, %v480
      %v505 = vpack.c.b16 %v485, %v483
      %v506 = vpack.c.b16 %v486, %v484
      %v507 = vpack.c.b16 %v489, %v487
      %v508 = vpack.c.b16 %v490, %v488
      %v509 = vpack.c.b16 %v493, %v491
      %v510 = vpack.c.b16 %v494, %v492
      %527 = vmatprep.subr.bf16.mxu0 %v510
      %528 = vmatpush1.bf16.msra.mxu0 %v509
      %529 = vmatprep.subr.bf16.mxu0 %v508
      %530 = vmatpush1.bf16.msra.mxu0 %v507
      %531 = vmatprep.subr.bf16.mxu0 %v506
      %532 = vmatpush1.bf16.msra.mxu0 %v505
      %533 = vmatprep.subr.bf16.mxu0 %v504
      %534 = vmatpush1.bf16.msra.mxu0 %v503
      %535 = vmatprep.subr.bf16.mxu0 %v502
      %536 = vmatpush1.bf16.msra.mxu0 %v501
      %537 = vmatprep.subr.bf16.mxu0 %v500
      %538 = vmatpush1.bf16.msra.mxu0 %v499
      %539 = vmatprep.subr.bf16.mxu0 %v498
      %540 = vmatpush1.bf16.msra.mxu0 %v497
      %541 = vmatprep.subr.bf16.mxu0 %v496
      %542 = vmatpush1.bf16.msra.mxu0 %v495
      %543 = vmatprep.subr.bf16.mxu0 0
      %544 = vmatpush2.bf16.msra.mxu0 0
      %545 = vmatprep.subr.bf16.mxu0 0
      %546 = vmatpush2.bf16.msra.mxu0 0
      %547 = vmatprep.subr.bf16.mxu0 0
      %548 = vmatpush2.bf16.msra.mxu0 0
      %549 = vmatprep.subr.bf16.mxu0 0
      %550 = vmatpush2.bf16.msra.mxu0 0
      %551 = vmatprep.subr.bf16.mxu0 0
      %552 = vmatpush2.bf16.msra.mxu0 0
      %553 = vmatprep.subr.bf16.mxu0 0
      %554 = vmatpush2.bf16.msra.mxu0 0
      %555 = vmatprep.subr.bf16.mxu0 0
      %556 = vmatpush2.bf16.msra.mxu0 0
      %557 = vmatprep.subr.bf16.mxu0 0
      %558 = vmatpush2.bf16.msra.mxu0 0
      %559 = vmatprep.mubr.bf16.mxu0 0
      %560 = vmatmul.mubr.bf16.gmra.mxu0 %v445
      %v561 = vpop.f32.mrf.mxu0
      %v562 = vadd.f32 %v434, %v561
      %v563 = vpop.f32.mrf.mxu0
      %v564 = vadd.f32 %v438, %v563
      %v565 = vpop.f32.mrf.mxu0
      %v566 = vadd.f32 %v434, %v565
      %v567 = vpop.f32.mrf.mxu0
      %v568 = vadd.f32 %v438, %v567
      %569 = vdwg.mxu0
      %v570 = vxor.u32 %v562, 2147483648
      %v571 = vxor.u32 %v564, 2147483648
      %v572 = vxor.u32 %v566, 2147483648
      %v573 = vxor.u32 %v568, 2147483648
      %v574 = vmul.f32 %v570, 1.442695
      %v575 = vpow.pop %v574
      %v576 = vmul.f32 %v571, 1.442695
      %v577 = vpow.pop %v576
      %v578 = vmul.f32 %v572, 1.442695
      %v579 = vpow.pop %v578
      %v580 = vmul.f32 %v573, 1.442695
      %v581 = vpow.pop %v580
      %v582 = vadd.f32 %v575, 1.0
      %v583 = vadd.f32 %v577, 1.0
      %v584 = vadd.f32 %v579, 1.0
      %v585 = vadd.f32 %v581, 1.0
      %v586 = vrcp.pop %v582
      %v587 = vmul.f32 1.0, %v586
      %v588 = vrcp.pop %v583
      %v589 = vmul.f32 1.0, %v588
      %v590 = vrcp.pop %v584
      %v591 = vmul.f32 1.0, %v590
      %v592 = vrcp.pop %v585
      %v593 = vmul.f32 1.0, %v592
      %v594 = vmul.f32 %v562, %v587
      %v595 = vmul.f32 %v564, %v589
      %v596 = vmul.f32 %v566, %v591
      %v597 = vmul.f32 %v568, %v593
      %vm602 = vcmask 1040384
      %v603 = vrot.slane %v594, 7
      %v604 = vrot.slane %v595, 7
      %v605 = vrot.slane %v596, 7
      %v606 = vsel %vm602, %v603, %v605
      %v607 = vrot.slane %v597, 7
      %v608 = vsel %vm602, %v604, %v607
      %v615 = vsel %vm602, 0.0, %v603
      %v616 = vsel %vm602, 0.0, %v604
      %v617 = vsel %vm602, %v605, 0.0
      %v618 = vsel %vm602, %v607, 0.0
      %v619 = vld [vmem:[%s3] sm:$0xff]
      %v620 = vld [vmem:[%s3 + $0x8] sm:$0xff]
      %v621 = vld [vmem:[%s3 + $0x10] sm:$0x1]
      %v622 = vld [vmem:[%s3 + $0x18] sm:$0x1]
      %625 = vrot.lane.b32.xlu0 %v616, 16
      %v626 = vpop.permute.xlu0 %625
      %627 = vrot.lane.b32.xlu0 %v608, 16
      %v628 = vpop.permute.xlu0 %627
      %629 = vrot.lane.b32.xlu0 %v618, 16
      %v630 = vpop.permute.xlu0 %629
      %636 = vrot.lane.b32.xlu0 %v615, 16
      %v637 = vpop.permute.xlu0 %636
      %638 = vrot.lane.b32.xlu0 %v606, 16
      %v639 = vpop.permute.xlu0 %638
      %640 = vrot.lane.b32.xlu0 %v617, 16
      %v641 = vpop.permute.xlu0 %640
      %vm642 = vcmask 130048
      %v643 = vsel %vm642, %v637, %v626
      %v644 = vsel %vm642, %v639, %v628
      %v645 = vsel %vm642, %v641, %v630
      %v652 = vsel %vm642, %v626, %v637
      %v653 = vsel %vm642, %v628, %v639
      %v654 = vsel %vm642, %v630, %v641
      %v655 = vlaneseq
      %v656 = vshrl.u32 %v655, 7
      %v657 = vsub.s32 0, %v656
      %v658 = vrot.slane %v619, %v657
      %v659 = vlaneseq
      %v660 = vshrl.u32 %v659, 7
      %v661 = vsub.s32 0, %v660
      %v662 = vrot.slane %v620, %v661
      %v663 = vmul.f32 %v652, %v658
      %v664 = vmul.f32 %v643, %v662
      %v665 = vmul.f32 %v653, %v658
      %v666 = vmul.f32 %v644, %v662
      %v667 = vadd.f32 %v663, 0.0
      %v668 = vadd.f32 %v664, 0.0
      %v669 = vadd.f32 %v665, 0.0
      %v670 = vadd.f32 %v666, 0.0
      %v671 = vlaneseq
      %v672 = vshrl.u32 %v671, 7
      %v673 = vsub.s32 3, %v672
      %v674 = vrot.slane %v619, %v673
      %v675 = vlaneseq
      %v676 = vshrl.u32 %v675, 7
      %v677 = vsub.s32 3, %v676
      %v678 = vrot.slane %v620, %v677
      %v679 = vmul.f32 %v652, %v674
      %v680 = vmul.f32 %v643, %v678
      %v681 = vmul.f32 %v653, %v674
      %v682 = vmul.f32 %v644, %v678
      %v683 = vmul.f32 %v654, %v674
      %v684 = vmul.f32 %v645, %v678
      %vm691 = vcmask 1046528
      %v692 = vrot.slane %v679, 1
      %v693 = vrot.slane %v681, 1
      %v694 = vsel %vm691, %v692, %v693
      %v695 = vrot.slane %v680, 1
      %v696 = vrot.slane %v682, 1
      %v697 = vsel %vm691, %v695, %v696
      %v698 = vrot.slane %v683, 1
      %v699 = vsel %vm691, %v693, %v698
      %v700 = vrot.slane %v684, 1
      %v701 = vsel %vm691, %v696, %v700
      %v706 = vadd.f32 %v667, %v694
      %v707 = vadd.f32 %v668, %v697
      %v708 = vadd.f32 %v669, %v699
      %v709 = vadd.f32 %v670, %v701
      %v710 = vlaneseq
      %v711 = vshrl.u32 %v710, 7
      %v712 = vsub.s32 6, %v711
      %v713 = vrot.slane %v619, %v712
      %v714 = vlaneseq
      %v715 = vshrl.u32 %v714, 7
      %v716 = vsub.s32 6, %v715
      %v717 = vrot.slane %v620, %v716
      %v718 = vmul.f32 %v652, %v713
      %v719 = vmul.f32 %v643, %v717
      %v720 = vmul.f32 %v653, %v713
      %v721 = vmul.f32 %v644, %v717
      %v722 = vmul.f32 %v654, %v713
      %v723 = vmul.f32 %v645, %v717
      %vm730 = vcmask 1045504
      %v731 = vrot.slane %v718, 2
      %v732 = vrot.slane %v720, 2
      %v733 = vsel %vm730, %v731, %v732
      %v734 = vrot.slane %v719, 2
      %v735 = vrot.slane %v721, 2
      %v736 = vsel %vm730, %v734, %v735
      %v737 = vrot.slane %v722, 2
      %v738 = vsel %vm730, %v732, %v737
      %v739 = vrot.slane %v723, 2
      %v740 = vsel %vm730, %v735, %v739
      %v745 = vadd.f32 %v706, %v733
      %v746 = vadd.f32 %v707, %v736
      %v747 = vadd.f32 %v708, %v738
      %v748 = vadd.f32 %v709, %v740
      %v749 = vlaneseq
      %v750 = vshrl.u32 %v749, 7
      %v751 = vsub.s32 1, %v750
      %v752 = vrot.slane %v619, %v751
      %v753 = vlaneseq
      %v754 = vshrl.u32 %v753, 7
      %v755 = vsub.s32 1, %v754
      %v756 = vrot.slane %v620, %v755
      %v757 = vmul.f32 %v615, %v752
      %v758 = vmul.f32 %v616, %v756
      %v759 = vmul.f32 %v606, %v752
      %v760 = vmul.f32 %v608, %v756
      %v761 = vadd.f32 %v745, %v757
      %v762 = vadd.f32 %v746, %v758
      %v763 = vadd.f32 %v747, %v759
      %v764 = vadd.f32 %v748, %v760
      %v765 = vlaneseq
      %v766 = vshrl.u32 %v765, 7
      %v767 = vsub.s32 4, %v766
      %v768 = vrot.slane %v619, %v767
      %v769 = vlaneseq
      %v770 = vshrl.u32 %v769, 7
      %v771 = vsub.s32 4, %v770
      %v772 = vrot.slane %v620, %v771
      %v773 = vmul.f32 %v615, %v768
      %v774 = vmul.f32 %v616, %v772
      %v775 = vmul.f32 %v606, %v768
      %v776 = vmul.f32 %v608, %v772
      %v777 = vmul.f32 %v617, %v768
      %v778 = vmul.f32 %v618, %v772
      %v785 = vrot.slane %v773, 1
      %v786 = vrot.slane %v775, 1
      %v787 = vsel %vm691, %v785, %v786
      %v788 = vrot.slane %v774, 1
      %v789 = vrot.slane %v776, 1
      %v790 = vsel %vm691, %v788, %v789
      %v791 = vrot.slane %v777, 1
      %v792 = vsel %vm691, %v786, %v791
      %v793 = vrot.slane %v778, 1
      %v794 = vsel %vm691, %v789, %v793
      %v799 = vadd.f32 %v761, %v787
      %v800 = vadd.f32 %v762, %v790
      %v801 = vadd.f32 %v763, %v792
      %v802 = vadd.f32 %v764, %v794
      %v803 = vlaneseq
      %v804 = vshrl.u32 %v803, 7
      %v805 = vsub.s32 7, %v804
      %v806 = vrot.slane %v619, %v805
      %v807 = vlaneseq
      %v808 = vshrl.u32 %v807, 7
      %v809 = vsub.s32 7, %v808
      %v810 = vrot.slane %v620, %v809
      %v811 = vmul.f32 %v615, %v806
      %v812 = vmul.f32 %v616, %v810
      %v813 = vmul.f32 %v606, %v806
      %v814 = vmul.f32 %v608, %v810
      %v815 = vmul.f32 %v617, %v806
      %v816 = vmul.f32 %v618, %v810
      %v823 = vrot.slane %v811, 2
      %v824 = vrot.slane %v813, 2
      %v825 = vsel %vm730, %v823, %v824
      %v826 = vrot.slane %v812, 2
      %v827 = vrot.slane %v814, 2
      %v828 = vsel %vm730, %v826, %v827
      %v829 = vrot.slane %v815, 2
      %v830 = vsel %vm730, %v824, %v829
      %v831 = vrot.slane %v816, 2
      %v832 = vsel %vm730, %v827, %v831
      %v837 = vadd.f32 %v799, %v825
      %v838 = vadd.f32 %v800, %v828
      %v839 = vadd.f32 %v801, %v830
      %v840 = vadd.f32 %v802, %v832
      %841 = vrot.lane.b32.xlu0 %v615, 112
      %v842 = vpop.permute.xlu0 %841
      %843 = vrot.lane.b32.xlu0 %v616, 112
      %v844 = vpop.permute.xlu0 %843
      %845 = vrot.lane.b32.xlu0 %v606, 112
      %v846 = vpop.permute.xlu0 %845
      %847 = vrot.lane.b32.xlu0 %v608, 112
      %v848 = vpop.permute.xlu0 %847
      %849 = vrot.lane.b32.xlu0 %v617, 112
      %v850 = vpop.permute.xlu0 %849
      %851 = vrot.lane.b32.xlu0 %v618, 112
      %v852 = vpop.permute.xlu0 %851
      %vm853 = vcmask 916480
      %v854 = vsel %vm853, %v842, %v844
      %v855 = vsel %vm853, %v846, %v848
      %v856 = vsel %vm853, %v850, %v852
      %v866 = vsel %vm853, %v844, %v842
      %v867 = vsel %vm853, %v848, %v846
      %v868 = vsel %vm853, %v852, %v850
      %v869 = vlaneseq
      %v870 = vshrl.u32 %v869, 7
      %v871 = vsub.s32 2, %v870
      %v872 = vrot.slane %v619, %v871
      %v873 = vlaneseq
      %v874 = vshrl.u32 %v873, 7
      %v875 = vsub.s32 2, %v874
      %v876 = vrot.slane %v620, %v875
      %v877 = vmul.f32 %v854, %v872
      %v878 = vmul.f32 %v866, %v876
      %v879 = vmul.f32 %v855, %v872
      %v880 = vmul.f32 %v867, %v876
      %v881 = vadd.f32 %v837, %v877
      %v882 = vadd.f32 %v838, %v878
      %v883 = vadd.f32 %v839, %v879
      %v884 = vadd.f32 %v840, %v880
      %v885 = vlaneseq
      %v886 = vshrl.u32 %v885, 7
      %v887 = vsub.s32 5, %v886
      %v888 = vrot.slane %v619, %v887
      %v889 = vlaneseq
      %v890 = vshrl.u32 %v889, 7
      %v891 = vsub.s32 5, %v890
      %v892 = vrot.slane %v620, %v891
      %v893 = vmul.f32 %v854, %v888
      %v894 = vmul.f32 %v866, %v892
      %v895 = vmul.f32 %v855, %v888
      %v896 = vmul.f32 %v867, %v892
      %v897 = vmul.f32 %v856, %v888
      %v898 = vmul.f32 %v868, %v892
      %v905 = vrot.slane %v893, 1
      %v906 = vrot.slane %v895, 1
      %v907 = vsel %vm691, %v905, %v906
      %v908 = vrot.slane %v894, 1
      %v909 = vrot.slane %v896, 1
      %v910 = vsel %vm691, %v908, %v909
      %v911 = vrot.slane %v897, 1
      %v912 = vsel %vm691, %v906, %v911
      %v913 = vrot.slane %v898, 1
      %v914 = vsel %vm691, %v909, %v913
      %v919 = vadd.f32 %v881, %v907
      %v920 = vadd.f32 %v882, %v910
      %v921 = vadd.f32 %v883, %v912
      %v922 = vadd.f32 %v884, %v914
      %v923 = vlaneseq
      %v924 = vshrl.u32 %v923, 7
      %v925 = vsub.s32 0, %v924
      %v926 = vrot.slane %v621, %v925
      %v927 = vlaneseq
      %v928 = vshrl.u32 %v927, 7
      %v929 = vsub.s32 0, %v928
      %v930 = vrot.slane %v622, %v929
      %v931 = vmul.f32 %v854, %v926
      %v932 = vmul.f32 %v866, %v930
      %v933 = vmul.f32 %v855, %v926
      %v934 = vmul.f32 %v867, %v930
      %v935 = vmul.f32 %v856, %v926
      %v936 = vmul.f32 %v868, %v930
      %v943 = vrot.slane %v931, 2
      %v944 = vrot.slane %v933, 2
      %v945 = vsel %vm730, %v943, %v944
      %v946 = vrot.slane %v932, 2
      %v947 = vrot.slane %v934, 2
      %v948 = vsel %vm730, %v946, %v947
      %v949 = vrot.slane %v935, 2
      %v950 = vsel %vm730, %v944, %v949
      %v951 = vrot.slane %v936, 2
      %v952 = vsel %vm730, %v947, %v951
      %v957 = vadd.f32 %v919, %v945
      %v958 = vadd.f32 %v920, %v948
      %v959 = vadd.f32 %v921, %v950
      %v960 = vadd.f32 %v922, %v952
      %v961 = vld [vmem:[%s4] sm:$0x3]
      %v963 = vlaneseq
      %v964 = vshrl.u32 %v963, 7
      %v965 = vsub.s32 0, %v964
      %v966 = vrot.slane %v961, %v965
      %v967 = vlaneseq
      %v968 = vshrl.u32 %v967, 7
      %v969 = vsub.s32 1, %v968
      %v970 = vrot.slane %v961, %v969
      %v973 = vadd.f32 %v957, %v966
      %v974 = vadd.f32 %v958, %v970
      %v975 = vadd.f32 %v959, %v966
      %v976 = vadd.f32 %v960, %v970
      %v977 = vxor.u32 %v973, 2147483648
      %v978 = vxor.u32 %v974, 2147483648
      %v979 = vxor.u32 %v975, 2147483648
      %v980 = vxor.u32 %v976, 2147483648
      %v981 = vmul.f32 %v977, 1.442695
      %v982 = vpow.pop %v981
      %v983 = vmul.f32 %v978, 1.442695
      %v984 = vpow.pop %v983
      %v985 = vmul.f32 %v979, 1.442695
      %v986 = vpow.pop %v985
      %v987 = vmul.f32 %v980, 1.442695
      %v988 = vpow.pop %v987
      %v989 = vadd.f32 %v982, 1.0
      %v990 = vadd.f32 %v984, 1.0
      %v991 = vadd.f32 %v986, 1.0
      %v992 = vadd.f32 %v988, 1.0
      %v993 = vrcp.pop %v989
      %v994 = vmul.f32 1.0, %v993
      %v995 = vrcp.pop %v990
      %v996 = vmul.f32 1.0, %v995
      %v997 = vrcp.pop %v991
      %v998 = vmul.f32 1.0, %v997
      %v999 = vrcp.pop %v992
      %v1000 = vmul.f32 1.0, %v999
      %v1001 = vmul.f32 %v973, %v994
      %v1002 = vmul.f32 %v974, %v996
      %v1003 = vmul.f32 %v975, %v998
      %v1004 = vmul.f32 %v976, %v1000
      %v1005 = vpack.c.bf16 %v1003, %v1001
      %v1006 = vpack.c.bf16 %v1004, %v1002
      %v1007 = vld [vmem:[%s5] sm:$0xf]
      %v1008 = vld [vmem:[%s5 + $0x4] sm:$0xf]
      %v1009 = vld [vmem:[%s5 + $0x8] sm:$0xf]
      %v1010 = vld [vmem:[%s5 + $0xc] sm:$0xf]
      %v1011 = vld [vmem:[%s5 + $0x10] sm:$0xf]
      %v1012 = vld [vmem:[%s5 + $0x14] sm:$0xf]
      %v1013 = vld [vmem:[%s5 + $0x18] sm:$0xf]
      %v1014 = vld [vmem:[%s5 + $0x1c] sm:$0xf]
      %v1015 = vld [vmem:[%s5 + $0x20] sm:$0xf]
      %v1016 = vld [vmem:[%s5 + $0x24] sm:$0xf]
      %v1017 = vld [vmem:[%s5 + $0x28] sm:$0xf]
      %v1018 = vld [vmem:[%s5 + $0x2c] sm:$0xf]
      %v1019 = vld [vmem:[%s5 + $0x30] sm:$0xf]
      %v1020 = vld [vmem:[%s5 + $0x34] sm:$0xf]
      %v1021 = vld [vmem:[%s5 + $0x38] sm:$0xf]
      %v1022 = vld [vmem:[%s5 + $0x3c] sm:$0xf]
      %v1023 = vld [vmem:[%s5 + $0x40] sm:$0xf]
      %v1024 = vld [vmem:[%s5 + $0x44] sm:$0xf]
      %v1025 = vld [vmem:[%s5 + $0x48] sm:$0xf]
      %v1026 = vld [vmem:[%s5 + $0x4c] sm:$0xf]
      %v1027 = vld [vmem:[%s5 + $0x50] sm:$0xf]
      %v1028 = vld [vmem:[%s5 + $0x54] sm:$0xf]
      %v1029 = vld [vmem:[%s5 + $0x58] sm:$0xf]
      %v1030 = vld [vmem:[%s5 + $0x5c] sm:$0xf]
      %v1031 = vld [vmem:[%s5 + $0x60] sm:$0xf]
      %v1032 = vld [vmem:[%s5 + $0x64] sm:$0xf]
      %v1033 = vld [vmem:[%s5 + $0x68] sm:$0xf]
      %v1034 = vld [vmem:[%s5 + $0x6c] sm:$0xf]
      %v1035 = vld [vmem:[%s5 + $0x70] sm:$0xf]
      %v1036 = vld [vmem:[%s5 + $0x74] sm:$0xf]
      %v1037 = vld [vmem:[%s5 + $0x78] sm:$0xf]
      %v1038 = vld [vmem:[%s5 + $0x7c] sm:$0xf]
      %v1039 = vld [vmem:[%s6] sm:$0x1]
      %v1041 = vlaneseq
      %v1042 = vshrl.u32 %v1041, 7
      %v1043 = vsub.s32 0, %v1042
      %v1044 = vrot.slane %v1039, %v1043
      %v1078 = vunpack.c.l.b16 %v1007
      %v1079 = vunpack.c.l.b16 %v1008
      %v1080 = vunpack.c.l.b16 %v1009
      %v1081 = vunpack.c.l.b16 %v1010
      %v1082 = vunpack.c.l.b16 %v1011
      %v1083 = vunpack.c.l.b16 %v1012
      %v1084 = vunpack.c.l.b16 %v1013
      %v1085 = vunpack.c.l.b16 %v1014
      %v1086 = vunpack.c.l.b16 %v1015
      %v1087 = vunpack.c.l.b16 %v1016
      %v1088 = vunpack.c.l.b16 %v1017
      %v1089 = vunpack.c.l.b16 %v1018
      %v1090 = vunpack.c.l.b16 %v1019
      %v1091 = vunpack.c.l.b16 %v1020
      %v1092 = vunpack.c.l.b16 %v1021
      %v1093 = vunpack.c.l.b16 %v1022
      %v1094 = vunpack.c.l.b16 %v1023
      %v1095 = vunpack.c.l.b16 %v1024
      %v1096 = vunpack.c.l.b16 %v1025
      %v1097 = vunpack.c.l.b16 %v1026
      %v1098 = vunpack.c.l.b16 %v1027
      %v1099 = vunpack.c.l.b16 %v1028
      %v1100 = vunpack.c.l.b16 %v1029
      %v1101 = vunpack.c.l.b16 %v1030
      %v1102 = vunpack.c.l.b16 %v1031
      %v1103 = vunpack.c.l.b16 %v1032
      %v1104 = vunpack.c.l.b16 %v1033
      %v1105 = vunpack.c.l.b16 %v1034
      %v1106 = vunpack.c.l.b16 %v1035
      %v1107 = vunpack.c.l.b16 %v1036
      %v1108 = vunpack.c.l.b16 %v1037
      %v1109 = vunpack.c.l.b16 %v1038
      %v1110 = vpack.c.b16 %v1079, %v1078
      %v1111 = vpack.c.b16 %v1081, %v1080
      %v1112 = vpack.c.b16 %v1083, %v1082
      %v1113 = vpack.c.b16 %v1085, %v1084
      %v1114 = vpack.c.b16 %v1087, %v1086
      %v1115 = vpack.c.b16 %v1089, %v1088
      %v1116 = vpack.c.b16 %v1091, %v1090
      %v1117 = vpack.c.b16 %v1093, %v1092
      %v1118 = vpack.c.b16 %v1095, %v1094
      %v1119 = vpack.c.b16 %v1097, %v1096
      %v1120 = vpack.c.b16 %v1099, %v1098
      %v1121 = vpack.c.b16 %v1101, %v1100
      %v1122 = vpack.c.b16 %v1103, %v1102
      %v1123 = vpack.c.b16 %v1105, %v1104
      %v1124 = vpack.c.b16 %v1107, %v1106
      %v1125 = vpack.c.b16 %v1109, %v1108
      %1142 = vmatprep.subr.bf16.mxu0 0
      %1143 = vmatpush1.bf16.msra.mxu0 %v1117
      %1144 = vmatprep.subr.bf16.mxu0 0
      %1145 = vmatpush1.bf16.msra.mxu0 %v1116
      %1146 = vmatprep.subr.bf16.mxu0 0
      %1147 = vmatpush1.bf16.msra.mxu0 %v1115
      %1148 = vmatprep.subr.bf16.mxu0 0
      %1149 = vmatpush1.bf16.msra.mxu0 %v1114
      %1150 = vmatprep.subr.bf16.mxu0 0
      %1151 = vmatpush1.bf16.msra.mxu0 %v1113
      %1152 = vmatprep.subr.bf16.mxu0 0
      %1153 = vmatpush1.bf16.msra.mxu0 %v1112
      %1154 = vmatprep.subr.bf16.mxu0 0
      %1155 = vmatpush1.bf16.msra.mxu0 %v1111
      %1156 = vmatprep.subr.bf16.mxu0 0
      %1157 = vmatpush1.bf16.msra.mxu0 %v1110
      %1158 = vmatprep.subr.bf16.mxu0 0
      %1159 = vmatpush2.bf16.msra.mxu0 %v1125
      %1160 = vmatprep.subr.bf16.mxu0 0
      %1161 = vmatpush2.bf16.msra.mxu0 %v1124
      %1162 = vmatprep.subr.bf16.mxu0 0
      %1163 = vmatpush2.bf16.msra.mxu0 %v1123
      %1164 = vmatprep.subr.bf16.mxu0 0
      %1165 = vmatpush2.bf16.msra.mxu0 %v1122
      %1166 = vmatprep.subr.bf16.mxu0 0
      %1167 = vmatpush2.bf16.msra.mxu0 %v1121
      %1168 = vmatprep.subr.bf16.mxu0 0
      %1169 = vmatpush2.bf16.msra.mxu0 %v1120
      %1170 = vmatprep.subr.bf16.mxu0 0
      %1171 = vmatpush2.bf16.msra.mxu0 %v1119
      %1172 = vmatprep.subr.bf16.mxu0 0
      %1173 = vmatpush2.bf16.msra.mxu0 %v1118
      %1174 = vmatprep.mubr.bf16.mxu0 %v1006
      %1175 = vmatmul.mubr.bf16.gmra.mxu0 %v1005
      %v1176 = vpop.f32.mrf.mxu0
      %v1177 = vadd.f32 %v1044, %v1176
      %v1178 = vpop.f32.mrf.mxu0
      %v1179 = vpop.f32.mrf.mxu0
      %v1180 = vadd.f32 %v1044, %v1179
      %v1181 = vpop.f32.mrf.mxu0
      %1182 = vdwg.mxu0
      %v1183 = vadd.f32 %v1177, %v1180
      %v1184 = vrot.slane %v1183, 4
      %v1185 = vadd.f32 %v1183, %v1184
      %v1186 = vrot.slane %v1185, 2
      %v1187 = vadd.f32 %v1185, %v1186
      %v1188 = vrot.slane %v1187, 1
      %v1189 = vadd.f32 %v1187, %v1188
      %v1190 = vld [vmem:[%s7] sm:$0xff]
      %v1191 = vld [vmem:[%s7 + $0x8] sm:$0xff]
      %v1192 = vld [vmem:[%s7 + $0x10] sm:$0xff]
      %v1193 = vld [vmem:[%s7 + $0x18] sm:$0xff]
      %v1194 = vld [vmem:[%s7 + $0x20] sm:$0xff]
      %v1195 = vld [vmem:[%s7 + $0x28] sm:$0xff]
      %v1196 = vld [vmem:[%s7 + $0x30] sm:$0xff]
      %v1197 = vld [vmem:[%s7 + $0x38] sm:$0xff]
      %v1198 = vld [vmem:[%s7 + $0x40] sm:$0xff]
      %v1199 = vld [vmem:[%s7 + $0x48] sm:$0xff]
      %v1200 = vld [vmem:[%s7 + $0x50] sm:$0xff]
      %v1201 = vld [vmem:[%s7 + $0x58] sm:$0xff]
      %v1202 = vld [vmem:[%s7 + $0x60] sm:$0xff]
      %v1203 = vld [vmem:[%s7 + $0x68] sm:$0xff]
      %v1204 = vld [vmem:[%s7 + $0x70] sm:$0xff]
      %v1205 = vld [vmem:[%s7 + $0x78] sm:$0xff]
      %v1206 = vld [vmem:[%s8] sm:$0x1]
      %1207 = vmatprep.subr.mxu0 0.0
      %1208 = vmatpush1.msra.mxu0 %v1205
      %1209 = vmatprep.subr.mxu0 0.0
      %1210 = vmatpush1.msra.mxu0 %v1204
      %1211 = vmatprep.subr.mxu0 0.0
      %1212 = vmatpush1.msra.mxu0 %v1203
      %1213 = vmatprep.subr.mxu0 0.0
      %1214 = vmatpush1.msra.mxu0 %v1202
      %1215 = vmatprep.subr.mxu0 0.0
      %1216 = vmatpush1.msra.mxu0 %v1201
      %1217 = vmatprep.subr.mxu0 0.0
      %1218 = vmatpush1.msra.mxu0 %v1200
      %1219 = vmatprep.subr.mxu0 0.0
      %1220 = vmatpush1.msra.mxu0 %v1199
      %1221 = vmatprep.subr.mxu0 0.0
      %1222 = vmatpush1.msra.mxu0 %v1198
      %1223 = vmatprep.subr.mxu0 0.0
      %1224 = vmatpush1.msra.mxu0 %v1197
      %1225 = vmatprep.subr.mxu0 0.0
      %1226 = vmatpush1.msra.mxu0 %v1196
      %1227 = vmatprep.subr.mxu0 0.0
      %1228 = vmatpush1.msra.mxu0 %v1195
      %1229 = vmatprep.subr.mxu0 0.0
      %1230 = vmatpush1.msra.mxu0 %v1194
      %1231 = vmatprep.subr.mxu0 0.0
      %1232 = vmatpush1.msra.mxu0 %v1193
      %1233 = vmatprep.subr.mxu0 0.0
      %1234 = vmatpush1.msra.mxu0 %v1192
      %1235 = vmatprep.subr.mxu0 0.0
      %1236 = vmatpush1.msra.mxu0 %v1191
      %1237 = vmatprep.subr.mxu0 0.0
      %1238 = vmatpush1.msra.mxu0 %v1190
      %1239 = vmatprep.subr.mxu0 0.0
      %1240 = vmatpush2.msra.mxu0 0.0
      %1241 = vmatprep.subr.mxu0 0.0
      %1242 = vmatpush2.msra.mxu0 0.0
      %1243 = vmatprep.subr.mxu0 0.0
      %1244 = vmatpush2.msra.mxu0 0.0
      %1245 = vmatprep.subr.mxu0 0.0
      %1246 = vmatpush2.msra.mxu0 0.0
      %1247 = vmatprep.subr.mxu0 0.0
      %1248 = vmatpush2.msra.mxu0 0.0
      %1249 = vmatprep.subr.mxu0 0.0
      %1250 = vmatpush2.msra.mxu0 0.0
      %1251 = vmatprep.subr.mxu0 0.0
      %1252 = vmatpush2.msra.mxu0 0.0
      %1253 = vmatprep.subr.mxu0 0.0
      %1254 = vmatpush2.msra.mxu0 0.0
      %1255 = vmatprep.subr.mxu0 0.0
      %1256 = vmatpush2.msra.mxu0 0.0
      %1257 = vmatprep.subr.mxu0 0.0
      %1258 = vmatpush2.msra.mxu0 0.0
      %1259 = vmatprep.subr.mxu0 0.0
      %1260 = vmatpush2.msra.mxu0 0.0
      %1261 = vmatprep.subr.mxu0 0.0
      %1262 = vmatpush2.msra.mxu0 0.0
      %1263 = vmatprep.subr.mxu0 0.0
      %1264 = vmatpush2.msra.mxu0 0.0
      %1265 = vmatprep.subr.mxu0 0.0
      %1266 = vmatpush2.msra.mxu0 0.0
      %1267 = vmatprep.subr.mxu0 0.0
      %1268 = vmatpush2.msra.mxu0 0.0
      %1269 = vmatprep.subr.mxu0 0.0
      %1270 = vmatpush2.msra.mxu0 0.0
      %1271 = vmatprep.mubr.f32.mxu0 0.0
      %1272 = vmatmul.mubr.f32.gmra.mxu0 %v1189
      %v1273 = vpop.f32.mrf.mxu0
      %v1274 = vadd.f32 %v1206, %v1273
      %v1275 = vpop.f32.mrf.mxu0
      %1276 = vdwg.mxu0
      %v1277 = vmax.f32 %v1274, 0.0
      %v1278 = vld [vmem:[%s9] sm:$0x3]
      %v1279 = vld [vmem:[%s10] sm:$0x1]
      %vm1280 = vcmask 15360
      %v1282 = vsel %vm1280, %v1277, 0
      %vm1284 = vcmask 1041408
      %v1286 = vsel %vm1284, %v1278, 0
      %1288 = vmatprep.subr.mxu0 0.0
      %1289 = vmatpush1.msra.mxu0 0.0
      %1290 = vmatprep.subr.mxu0 0.0
      %1291 = vmatpush1.msra.mxu0 0.0
      %1292 = vmatprep.subr.mxu0 0.0
      %1293 = vmatpush1.msra.mxu0 0.0
      %1294 = vmatprep.subr.mxu0 0.0
      %1295 = vmatpush1.msra.mxu0 0.0
      %1296 = vmatprep.subr.mxu0 0.0
      %1297 = vmatpush1.msra.mxu0 0.0
      %1298 = vmatprep.subr.mxu0 0.0
      %1299 = vmatpush1.msra.mxu0 0.0
      %1300 = vmatprep.subr.mxu0 0.0
      %1301 = vmatpush1.msra.mxu0 0.0
      %1302 = vmatprep.subr.mxu0 0.0
      %1303 = vmatpush1.msra.mxu0 0.0
      %1304 = vmatprep.subr.mxu0 0.0
      %1305 = vmatpush1.msra.mxu0 0.0
      %1306 = vmatprep.subr.mxu0 0.0
      %1307 = vmatpush1.msra.mxu0 0.0
      %1308 = vmatprep.subr.mxu0 0.0
      %1309 = vmatpush1.msra.mxu0 0.0
      %1310 = vmatprep.subr.mxu0 0.0
      %1311 = vmatpush1.msra.mxu0 0.0
      %1312 = vmatprep.subr.mxu0 0.0
      %1313 = vmatpush1.msra.mxu0 0.0
      %1314 = vmatprep.subr.mxu0 0.0
      %1315 = vmatpush1.msra.mxu0 0.0
      %1316 = vmatprep.subr.mxu0 0.0
      %1317 = vmatpush1.msra.mxu0 0.0
      %1318 = vmatprep.subr.mxu0 0.0
      %1319 = vmatpush1.msra.mxu0 %v1286
      %1320 = vmatprep.subr.mxu0 0.0
      %1321 = vmatpush2.msra.mxu0 0.0
      %1322 = vmatprep.subr.mxu0 0.0
      %1323 = vmatpush2.msra.mxu0 0.0
      %1324 = vmatprep.subr.mxu0 0.0
      %1325 = vmatpush2.msra.mxu0 0.0
      %1326 = vmatprep.subr.mxu0 0.0
      %1327 = vmatpush2.msra.mxu0 0.0
      %1328 = vmatprep.subr.mxu0 0.0
      %1329 = vmatpush2.msra.mxu0 0.0
      %1330 = vmatprep.subr.mxu0 0.0
      %1331 = vmatpush2.msra.mxu0 0.0
      %1332 = vmatprep.subr.mxu0 0.0
      %1333 = vmatpush2.msra.mxu0 0.0
      %1334 = vmatprep.subr.mxu0 0.0
      %1335 = vmatpush2.msra.mxu0 0.0
      %1336 = vmatprep.subr.mxu0 0.0
      %1337 = vmatpush2.msra.mxu0 0.0
      %1338 = vmatprep.subr.mxu0 0.0
      %1339 = vmatpush2.msra.mxu0 0.0
      %1340 = vmatprep.subr.mxu0 0.0
      %1341 = vmatpush2.msra.mxu0 0.0
      %1342 = vmatprep.subr.mxu0 0.0
      %1343 = vmatpush2.msra.mxu0 0.0
      %1344 = vmatprep.subr.mxu0 0.0
      %1345 = vmatpush2.msra.mxu0 0.0
      %1346 = vmatprep.subr.mxu0 0.0
      %1347 = vmatpush2.msra.mxu0 0.0
      %1348 = vmatprep.subr.mxu0 0.0
      %1349 = vmatpush2.msra.mxu0 0.0
      %1350 = vmatprep.subr.mxu0 0.0
      %1351 = vmatpush2.msra.mxu0 0.0
      %1352 = vmatprep.mubr.f32.mxu0 0.0
      %1353 = vmatmul.mubr.f32.gmra.mxu0 %v1282
      %v1354 = vpop.f32.mrf.mxu0
      %v1355 = vadd.f32 %v1279, %v1354
      %v1356 = vpop.f32.mrf.mxu0
      %1357 = vdwg.mxu0
      %v1358 = vxor.u32 %v1355, 2147483648
      %v1359 = vmul.f32 %v1358, 1.442695
      %v1360 = vpow.pop %v1359
      %v1361 = vadd.f32 %v1360, 1.0
      %v1362 = vrcp.pop %v1361
      %v1363 = vmul.f32 1.0, %v1362
      %1365 = vrot.lane.b32.xlu0 %v1363, 8
      %v1366 = vpop.permute.xlu0 %1365
      %1368 = vrot.lane.b32.xlu0 %v1363, 16
      %v1369 = vpop.permute.xlu0 %1368
      %1371 = vrot.lane.b32.xlu0 %v1363, 24
      %v1372 = vpop.permute.xlu0 %1371
      %1374 = vrot.lane.b32.xlu0 %v1363, 32
      %v1375 = vpop.permute.xlu0 %1374
      %1377 = vrot.lane.b32.xlu0 %v1363, 40
      %v1378 = vpop.permute.xlu0 %1377
      %1380 = vrot.lane.b32.xlu0 %v1363, 48
      %v1381 = vpop.permute.xlu0 %1380
      %1383 = vrot.lane.b32.xlu0 %v1363, 56
      %v1384 = vpop.permute.xlu0 %1383
      %1386 = vrot.lane.b32.xlu0 %v1363, 64
      %v1387 = vpop.permute.xlu0 %1386
      %1389 = vrot.lane.b32.xlu0 %v1363, 72
      %v1390 = vpop.permute.xlu0 %1389
      %1392 = vrot.lane.b32.xlu0 %v1363, 80
      %v1393 = vpop.permute.xlu0 %1392
      %1395 = vrot.lane.b32.xlu0 %v1363, 88
      %v1396 = vpop.permute.xlu0 %1395
      %1398 = vrot.lane.b32.xlu0 %v1363, 96
      %v1399 = vpop.permute.xlu0 %1398
      %1401 = vrot.lane.b32.xlu0 %v1363, 104
      %v1402 = vpop.permute.xlu0 %1401
      %1404 = vrot.lane.b32.xlu0 %v1363, 112
      %v1405 = vpop.permute.xlu0 %1404
      %1407 = vrot.lane.b32.xlu0 %v1363, 120
      %v1408 = vpop.permute.xlu0 %1407
      %vm1410 = vcmask 64512
      %v1411 = vsel %vm1410, %v1363, %v1366
      %v1412 = vsel %vm642, %v1411, %v1369
      %vm1413 = vcmask 195584
      %v1414 = vsel %vm1413, %v1412, %v1372
      %vm1415 = vcmask 261120
      %v1416 = vsel %vm1415, %v1414, %v1375
      %vm1417 = vcmask 326656
      %v1418 = vsel %vm1417, %v1416, %v1378
      %vm1419 = vcmask 392192
      %v1420 = vsel %vm1419, %v1418, %v1381
      %vm1421 = vcmask 457728
      %v1422 = vsel %vm1421, %v1420, %v1384
      %vm1423 = vcmask 523264
      %v1424 = vsel %vm1423, %v1422, %v1387
      %vm1425 = vcmask 588800
      %v1426 = vsel %vm1425, %v1424, %v1390
      %vm1427 = vcmask 654336
      %v1428 = vsel %vm1427, %v1426, %v1393
      %vm1429 = vcmask 719872
      %v1430 = vsel %vm1429, %v1428, %v1396
      %vm1431 = vcmask 785408
      %v1432 = vsel %vm1431, %v1430, %v1399
      %vm1433 = vcmask 850944
      %v1434 = vsel %vm1433, %v1432, %v1402
      %v1435 = vsel %vm853, %v1434, %v1405
      %vm1436 = vcmask 982016
      %v1437 = vsel %vm1436, %v1435, %v1408
      %v1438 = vlaneseq
      %v1439 = vshrl.u32 %v1438, 7
      %v1440 = vsub.s32 0, %v1439
      %v1441 = vrot.slane %v1437, %v1440
      %v1442 = vmul.f32 %v1177, %v1441
      %v1443 = vmul.f32 %v1180, %v1441
      %v1444 = vunpack.c.l.bf16 %v411
      %v1445 = vunpack.c.l.bf16 %v412
      %v1446 = vadd.f32 %v1442, %v1444
      %v1447 = vadd.f32 %v1443, %v1445
      %1448 = vst [vmem:[%s408] sm:$0xff] %v1446
      %1449 = vst [vmem:[%s408 + $0x8] sm:$0xff] %v1447
      %s1450 = smul.u32 2, %s27
      %p1451 = scmp.lt.s32.totalorder %s26, 1
      %s1452 = scalar_select %p1451, %s26, 1
      %p1453 = scmp.lt.s32.totalorder %s1450, 1
      %s1454 = scalar_select %p1453, %s1450, 1
      %s1455 = smul.addr %s1452, 2
      %s1456 = sadd.s32 %s1454, %s1455
      %s1457 = smul.addr %s1456, 8
      %s1458 = scalar_lea.vmem %s11, %s1457
      // Predicated region
      $region65: #{mobilenet_block.1} parent=63 // pred_check
        %p1459 = pneg %p290
      $region66: #{mobilenet_block.1} parent=63 // pred_check_branch
        %1461 = sbr.rel (%p1459) target = $region68
      $region67: #{mobilenet_block.1} parent=63 // pred_region
        %s1462 = smul.u32 2, %s27
      $region68: #{mobilenet_block.1} parent=63 // pred_fallthru
        _
    $region64: #{mobilenet_block.1} parent=5 // pred_fallthru
      _
    %p1463 = scmp.le.s32.totalorder 2, %s17
    // Predicated region
    $region69: #{mobilenet_block.1} parent=5 // pred_check
      %p1464 = pneg %p1463
    $region70: #{mobilenet_block.1} parent=5 // pred_check_branch
      %1466 = sbr.rel (%p1464) target = $region72
    $region71: #{mobilenet_block.1} parent=5 // pred_region
      %s1467 = ssub.s32 %s17, 2
      // Predicated region
      $region73: #{mobilenet_block.1} parent=71 // pred_check
        %p1468 = pneg %p296
      $region74: #{mobilenet_block.1} parent=71 // pred_check_branch
        %1470 = sbr.rel (%p1468) target = $region76
      $region75: #{mobilenet_block.1} parent=71 // pred_region
        %s1471 = smul.u32 2, %s29
        %p1472 = scmp.lt.s32.totalorder %s28, 1
        %s1473 = scalar_select %p1472, %s28, 1
        %p1474 = scmp.lt.s32.totalorder %s1471, 1
        %s1475 = scalar_select %p1474, %s1471, 1
        %s1476 = smul.addr %s1473, 2
        %s1477 = sadd.s32 %s1475, %s1476
        %s1478 = smul.addr %s1477, 8
        %s1479 = scalar_lea.vmem %s11, %s1478
      $region76: #{mobilenet_block.1} parent=71 // pred_fallthru
        _
    $region72: #{mobilenet_block.1} parent=5 // pred_fallthru
      _
  $region6: #{mobilenet_block.1} parent=0 // loop_footer
    %s21 = sadd.s32 1, %s17
  $region7: #{mobilenet_block.1} parent=0 // loop_footer_branch
    %16 = sbr.rel target = $region3
  $region8: #{mobilenet_block.1} parent=0 // loop_exit
    _

</llo_original>
